<compile_context>
chip_gen: v5e
topology: v5e:2x2
jax: 0.10.0
libtpu: 0.0.40
codegen_flags: <defaults>
</compile_context>

<pallas_src>
import functools

import jax
import jax.numpy as jnp
from jax.experimental import pallas as pl
from jax.experimental.pallas import tpu as pltpu  # noqa: F401  (TPU backend)


def _vq_kernel(h_ref, w_ref, b_ref, en_ref, quant_ref, idx_ref, loss_ref,
               *, B, T, use_bf16):
    D = h_ref.shape[1]
    K = en_ref.shape[0]
    BT = B * T
    CK = 128 if (K >= 128 and K % 128 == 0) else K   # codebook chunk (lane width)
    NC = K // CK

    # --- self.projection(h_none_cls): one MXU matmul over the full token slab ---
    h_proj = (jnp.dot(h_ref[...], w_ref[...], preferred_element_type=jnp.float32)
              + b_ref[...])                                             # (B*T, D)

    # --- h_q = h_none_cls / h_none_cls.norm(dim=1, keepdim=True) ---
    # dim=1 of (B, T, D) is the token axis (no eps, matching torch behaviour).
    hp3 = h_proj.reshape(B, T, D)
    inv_tok = jax.lax.rsqrt(jnp.sum(hp3 * hp3, axis=1, keepdims=True))  # (B, 1, D)
    z = (hp3 * inv_tok).reshape(BT, D)                                  # (B*T, D)

    # --- quantize(z): F.normalize(z, dim=-1)  (eps folded into sq-norm clamp) ---
    zn = z * jax.lax.rsqrt(
        jnp.maximum(jnp.sum(z * z, axis=-1, keepdims=True), 1e-24))     # (B*T, D)

    mm_dtype = jnp.bfloat16 if use_bf16 else jnp.float32
    zn_mm = zn.astype(mm_dtype)

    # --- chunked cosine argmax + one-hot codebook gather ------------------------
    # argmin(|z|^2 + |e|^2 - 2 z.e) == argmax(z.e) for unit-norm rows; the running
    # strict '>' keeps the first maximal code, matching torch.argmin tie-breaking.
    def chunk_body(c, carry):
        best_val, best_idx, zq = carry
        start = pl.multiple_of(c * CK, CK)
        en_c = en_ref[pl.ds(start, CK), :]                              # (CK, D)
        en_c_mm = en_c.astype(mm_dtype)
        scores = jax.lax.dot_general(                                   # (B*T, CK)
            zn_mm, en_c_mm, dimension_numbers=(((1,), (1,)), ((), ())),
            preferred_element_type=jnp.float32)
        cmax = jnp.max(scores, axis=-1, keepdims=True)                  # (B*T, 1)
        carg = jnp.argmax(scores, axis=-1).astype(jnp.int32)            # (B*T,)
        better = cmax > best_val                                        # (B*T, 1)
        onehot = ((jax.lax.broadcasted_iota(jnp.int32, (BT, CK), 1)
                   == carg[:, None]) & better).astype(mm_dtype)         # (B*T, CK)
        zq_c = jnp.dot(onehot, en_c_mm,
                       preferred_element_type=jnp.float32)              # (B*T, D)
        zq = jnp.where(better, zq_c, zq)
        best_idx = jnp.where(better[:, 0], c * CK + carg, best_idx)
        best_val = jnp.maximum(best_val, cmax)
        return best_val, best_idx, zq

    init = (jnp.full((BT, 1), -jnp.inf, dtype=jnp.float32),
            jnp.zeros((BT,), dtype=jnp.int32),
            jnp.zeros((BT, D), dtype=jnp.float32))
    _, best_idx, z_q = jax.lax.fori_loop(0, NC, chunk_body, init, unroll=True)

    # forward value of mean((zq.detach()-z)^2) + 0.33*mean((zq-z.detach())^2)
    # == 1.33 * mean((zq - z)^2); emit per-lane partial sums, wrapper finishes it.
    diff = z_q - z
    loss_ref[...] = jnp.sum(diff * diff, axis=0, keepdims=True)         # (1, D)

    # straight-through: z_q = z + (z_q - z).detach() -> forward value is z_q
    quant_ref[...] = z_q
    idx_ref[0, :] = best_idx


def vq_encode(h, w_proj, b_proj, codebook, *, use_bf16_matmul=False):
    """VQModel stage-2 forward path (encode -> quantize).

    h        : (B, 1+T, D) encoder output (cls token at position 0)
    w_proj   : (D, D)  projection weight, applied as  x @ w_proj
    b_proj   : (D,)    projection bias
    codebook : (K, D)  tok_embeddings.weight

    Returns (quant (B, T, D), tk_labels (B, T) int32, qloss scalar).
    """
    B, Tp1, D = h.shape
    T = Tp1 - 1
    BT = B * T

    # cls strip + flatten in the wrapper: XLA fuses the offset copy into the
    # producer and the kernel's input slab arrives (8,128)-aligned.
    h_flat = h[:, 1:, :].reshape(BT, D)

    # Pre-normalize the codebook rows once per call (reused across the training
    # step); eps folded into the sq-norm clamp like F.normalize(eps=1e-12).
    en = codebook * jax.lax.rsqrt(
        jnp.maximum(jnp.sum(codebook * codebook, axis=-1, keepdims=True), 1e-24))

    kernel = functools.partial(_vq_kernel, B=B, T=T, use_bf16=use_bf16_matmul)

    # Single invocation (no grid): the whole working set is ~100 KB, far under the
    # VMEM limit on v5e/v6e/v7x, so every operand is mapped whole into VMEM.
    quant_f, idx_f, loss_part = pl.pallas_call(
        kernel,
        out_shape=(
            jax.ShapeDtypeStruct((BT, D), jnp.float32),   # flat quant slab
            jax.ShapeDtypeStruct((1, BT), jnp.int32),     # lane-dense indices
            jax.ShapeDtypeStruct((1, D), jnp.float32),    # loss partial sums
        ),
    )(h_flat, w_proj, b_proj.reshape(1, D), en)

    qloss = (1.0 + 0.33) * jnp.sum(loss_part) / (BT * D)
    quant = quant_f.reshape(B, T, D)          # free row-major view
    tk_labels = idx_f.reshape(B, T)           # tk_labels.view(input.shape[0], -1)
    return quant, tk_labels, qloss


def _reference(h, w_proj, b_proj, codebook):
    """Pure-JAX reference of the same math for a sanity check."""
    h_tok = h[:, 1:, :]
    h_proj = jnp.einsum("btd,de->bte", h_tok, w_proj) + b_proj
    z = h_proj / jnp.linalg.norm(h_proj, axis=1, keepdims=True)
    B, T, D = z.shape
    zf = z.reshape(-1, D)
    zn = zf / jnp.maximum(jnp.linalg.norm(zf, axis=-1, keepdims=True), 1e-12)
    en = codebook / jnp.maximum(
        jnp.linalg.norm(codebook, axis=-1, keepdims=True), 1e-12)
    d = (jnp.sum(zn ** 2, -1, keepdims=True) + jnp.sum(en ** 2, -1)[None]
         - 2.0 * zn @ en.T)
    idx = jnp.argmin(d, axis=-1)
    zq = en[idx]
    loss = 1.33 * jnp.mean((zq - zf) ** 2)
    return zq.reshape(B, T, D), idx.reshape(B, T).astype(jnp.int32), loss


if __name__ == "__main__":
    # Small shapes consistent with the module:
    #   batch B=2, tokens T=64 (+1 cls), embed_dim D=32, codebook K=256.
    B, T, D, K = 2, 64, 32, 256
    key = jax.random.PRNGKey(0)
    k1, k2, k3, k4 = jax.random.split(key, 4)

    h = jax.random.normal(k1, (B, T + 1, D), dtype=jnp.float32)       # encoder out
    w_proj = jax.random.normal(k2, (D, D), dtype=jnp.float32) * 0.05  # Linear W^T
    b_proj = jax.random.normal(k3, (D,), dtype=jnp.float32) * 0.01
    # tok_embeddings.weight.uniform_(-1/K, 1/K)
    codebook = jax.random.uniform(k4, (K, D), dtype=jnp.float32,
                                  minval=-1.0 / K, maxval=1.0 / K)

    quant, tk_labels, qloss = jax.jit(vq_encode)(h, w_proj, b_proj, codebook)
    jax.block_until_ready((quant, tk_labels, qloss))

    # sanity check against pure-JAX reference
    q_ref, idx_ref_, loss_ref_ = _reference(h, w_proj, b_proj, codebook)
    assert quant.shape == (B, T, D) and tk_labels.shape == (B, T)
    assert jnp.allclose(quant, q_ref, atol=1e-4, rtol=1e-4)
    assert jnp.array_equal(tk_labels, idx_ref_)
    assert jnp.allclose(qloss, loss_ref_, atol=1e-5, rtol=1e-4)

    print("KERNEL_OK")
</pallas_src>

<mosaic_0001>
module attributes {stable_mosaic.version = 11 : i64} {
  func.func @_vq_kernel(%arg0: memref<128x32xf32, #tpu.memory_space<vmem>>, %arg1: memref<32x32xf32, #tpu.memory_space<vmem>>, %arg2: memref<1x32xf32, #tpu.memory_space<vmem>>, %arg3: memref<256x32xf32, #tpu.memory_space<vmem>>, %arg4: memref<128x32xf32, #tpu.memory_space<vmem>>, %arg5: memref<1x128xi32, #tpu.memory_space<vmem>>, %arg6: memref<1x32xf32, #tpu.memory_space<vmem>>) attributes {dimension_semantics = [], scalar_prefetch = 0 : i64, scratch_operands = 0 : i64, tpu.core_type = #tpu.core_type<tc>} {
    %c0 = arith.constant 0 : index
    %c0_0 = arith.constant 0 : index
    %0 = vector.load %arg0[%c0, %c0_0] : memref<128x32xf32, #tpu.memory_space<vmem>>, vector<128x32xf32>
    %c0_1 = arith.constant 0 : index
    %c0_2 = arith.constant 0 : index
    %1 = vector.load %arg1[%c0_1, %c0_2] : memref<32x32xf32, #tpu.memory_space<vmem>>, vector<32x32xf32>
    %cst = arith.constant dense<0.000000e+00> : vector<128x32xf32>
    %2 = tpu.matmul %0, %1, %cst {dimension_numbers = #tpu.dot_dimension_numbers<[1], [0], [0], [1], [0, 0, 1, 1], [], []>} : vector<128x32xf32>, vector<32x32xf32>, vector<128x32xf32> -> vector<128x32xf32>
    %c0_3 = arith.constant 0 : index
    %c0_4 = arith.constant 0 : index
    %3 = vector.load %arg2[%c0_3, %c0_4] : memref<1x32xf32, #tpu.memory_space<vmem>>, vector<1x32xf32>
    %4 = vector.broadcast %3 : vector<1x32xf32> to vector<128x32xf32>
    %5 = arith.addf %2, %4 : vector<128x32xf32>
    %6 = vector.shape_cast %5 : vector<128x32xf32> to vector<2x64x32xf32>
    %7 = arith.mulf %6, %6 : vector<2x64x32xf32>
    %cst_5 = arith.constant dense<0.000000e+00> : vector<2x32xf32>
    %8 = vector.multi_reduction <add>, %7, %cst_5 [1] : vector<2x64x32xf32> to vector<2x32xf32>
    %9 = vector.shape_cast %8 : vector<2x32xf32> to vector<2x1x32xf32>
    %10 = math.rsqrt %9 : vector<2x1x32xf32>
    %11 = vector.broadcast %10 : vector<2x1x32xf32> to vector<2x64x32xf32>
    %12 = arith.mulf %6, %11 : vector<2x64x32xf32>
    %13 = vector.shape_cast %12 : vector<2x64x32xf32> to vector<128x32xf32>
    %14 = arith.mulf %13, %13 : vector<128x32xf32>
    %cst_6 = arith.constant dense<0.000000e+00> : vector<128xf32>
    %15 = vector.multi_reduction <add>, %14, %cst_6 [1] : vector<128x32xf32> to vector<128xf32>
    %16 = vector.shape_cast %15 : vector<128xf32> to vector<128x1xf32>
    %cst_7 = arith.constant 1.000000e-24 : f32
    %17 = vector.broadcast %cst_7 : f32 to vector<128x1xf32>
    %18 = arith.maximumf %16, %17 : vector<128x1xf32>
    %19 = math.rsqrt %18 : vector<128x1xf32>
    %20 = vector.broadcast %19 : vector<128x1xf32> to vector<128x32xf32>
    %21 = arith.mulf %13, %20 : vector<128x32xf32>
    %cst_8 = arith.constant 0xFF800000 : f32
    %22 = vector.broadcast %cst_8 : f32 to vector<128x1xf32>
    %c0_i32 = arith.constant 0 : i32
    %23 = vector.broadcast %c0_i32 : i32 to vector<128xi32>
    %cst_9 = arith.constant 0.000000e+00 : f32
    %24 = vector.broadcast %cst_9 : f32 to vector<128x32xf32>
    %c0_i32_10 = arith.constant 0 : i32
    %c128_i32 = arith.constant 128 : i32
    %25 = arith.muli %c0_i32_10, %c128_i32 : i32
    %26 = tpu.assume_multiple %25, 128 : i32
    %27 = arith.index_cast %26 : i32 to index
    %c0_11 = arith.constant 0 : index
    %28 = vector.load %arg3[%27, %c0_11] : memref<256x32xf32, #tpu.memory_space<vmem>>, vector<128x32xf32>
    %cst_12 = arith.constant dense<0.000000e+00> : vector<128x128xf32>
    %29 = tpu.matmul %21, %28, %cst_12 {dimension_numbers = #tpu.dot_dimension_numbers<[1], [1], [0], [0], [0, 0, 1, 0], [], []>} : vector<128x32xf32>, vector<128x32xf32>, vector<128x128xf32> -> vector<128x128xf32>
    %cst_13 = arith.constant dense<0xFF800000> : vector<128xf32>
    %30 = vector.multi_reduction <maximumf>, %29, %cst_13 [1] : vector<128x128xf32> to vector<128xf32>
    %31 = vector.shape_cast %30 : vector<128xf32> to vector<128x1xf32>
    %32 = tpu.reduce_index %29 {axis = 1 : i32, kind = #tpu.reduction_kind<arg_max>} : vector<128x128xf32> -> vector<128xi32>
    %33 = arith.cmpf ogt, %31, %22 : vector<128x1xf32>
    %34 = tpu.iota {dimensions = array<i32: 1>} : vector<128x128xi32>
    %35 = vector.shape_cast %32 : vector<128xi32> to vector<128x1xi32>
    %36 = vector.broadcast %35 : vector<128x1xi32> to vector<128x128xi32>
    %37 = arith.cmpi eq, %34, %36 : vector<128x128xi32>
    %38 = vector.broadcast %33 : vector<128x1xi1> to vector<128x128xi1>
    %39 = arith.andi %37, %38 : vector<128x128xi1>
    %40 = arith.extui %39 : vector<128x128xi1> to vector<128x128xi32>
    %41 = arith.sitofp %40 : vector<128x128xi32> to vector<128x128xf32>
    %cst_14 = arith.constant dense<0.000000e+00> : vector<128x32xf32>
    %42 = tpu.matmul %41, %28, %cst_14 {dimension_numbers = #tpu.dot_dimension_numbers<[1], [0], [0], [1], [0, 0, 1, 1], [], []>} : vector<128x128xf32>, vector<128x32xf32>, vector<128x32xf32> -> vector<128x32xf32>
    %43 = vector.shape_cast %33 : vector<128x1xi1> to vector<128x1xi1>
    %44 = vector.broadcast %43 : vector<128x1xi1> to vector<128x32xi1>
    %45 = arith.select %44, %42, %24 : vector<128x32xi1>, vector<128x32xf32>
    %46 = vector.shape_cast %33 : vector<128x1xi1> to vector<128xi1>
    %c128_i32_15 = arith.constant 128 : i32
    %47 = arith.muli %c0_i32_10, %c128_i32_15 : i32
    %48 = vector.broadcast %47 : i32 to vector<128xi32>
    %49 = arith.addi %48, %32 : vector<128xi32>
    %50 = arith.select %46, %49, %23 : vector<128xi1>, vector<128xi32>
    %51 = arith.maximumf %22, %31 : vector<128x1xf32>
    %c1_i32 = arith.constant 1 : i32
    %c128_i32_16 = arith.constant 128 : i32
    %52 = arith.muli %c1_i32, %c128_i32_16 : i32
    %53 = tpu.assume_multiple %52, 128 : i32
    %54 = arith.index_cast %53 : i32 to index
    %c0_17 = arith.constant 0 : index
    %55 = vector.load %arg3[%54, %c0_17] : memref<256x32xf32, #tpu.memory_space<vmem>>, vector<128x32xf32>
    %cst_18 = arith.constant dense<0.000000e+00> : vector<128x128xf32>
    %56 = tpu.matmul %21, %55, %cst_18 {dimension_numbers = #tpu.dot_dimension_numbers<[1], [1], [0], [0], [0, 0, 1, 0], [], []>} : vector<128x32xf32>, vector<128x32xf32>, vector<128x128xf32> -> vector<128x128xf32>
    %cst_19 = arith.constant dense<0xFF800000> : vector<128xf32>
    %57 = vector.multi_reduction <maximumf>, %56, %cst_19 [1] : vector<128x128xf32> to vector<128xf32>
    %58 = vector.shape_cast %57 : vector<128xf32> to vector<128x1xf32>
    %59 = tpu.reduce_index %56 {axis = 1 : i32, kind = #tpu.reduction_kind<arg_max>} : vector<128x128xf32> -> vector<128xi32>
    %60 = arith.cmpf ogt, %58, %51 : vector<128x1xf32>
    %61 = tpu.iota {dimensions = array<i32: 1>} : vector<128x128xi32>
    %62 = vector.shape_cast %59 : vector<128xi32> to vector<128x1xi32>
    %63 = vector.broadcast %62 : vector<128x1xi32> to vector<128x128xi32>
    %64 = arith.cmpi eq, %61, %63 : vector<128x128xi32>
    %65 = vector.broadcast %60 : vector<128x1xi1> to vector<128x128xi1>
    %66 = arith.andi %64, %65 : vector<128x128xi1>
    %67 = arith.extui %66 : vector<128x128xi1> to vector<128x128xi32>
    %68 = arith.sitofp %67 : vector<128x128xi32> to vector<128x128xf32>
    %cst_20 = arith.constant dense<0.000000e+00> : vector<128x32xf32>
    %69 = tpu.matmul %68, %55, %cst_20 {dimension_numbers = #tpu.dot_dimension_numbers<[1], [0], [0], [1], [0, 0, 1, 1], [], []>} : vector<128x128xf32>, vector<128x32xf32>, vector<128x32xf32> -> vector<128x32xf32>
    %70 = vector.shape_cast %60 : vector<128x1xi1> to vector<128x1xi1>
    %71 = vector.broadcast %70 : vector<128x1xi1> to vector<128x32xi1>
    %72 = arith.select %71, %69, %45 : vector<128x32xi1>, vector<128x32xf32>
    %73 = vector.shape_cast %60 : vector<128x1xi1> to vector<128xi1>
    %c128_i32_21 = arith.constant 128 : i32
    %74 = arith.muli %c1_i32, %c128_i32_21 : i32
    %75 = vector.broadcast %74 : i32 to vector<128xi32>
    %76 = arith.addi %75, %59 : vector<128xi32>
    %77 = arith.select %73, %76, %50 : vector<128xi1>, vector<128xi32>
    %78 = arith.maximumf %51, %58 : vector<128x1xf32>
    %c2_i32 = arith.constant 2 : i32
    %79 = arith.subf %72, %13 : vector<128x32xf32>
    %80 = arith.mulf %79, %79 : vector<128x32xf32>
    %cst_22 = arith.constant dense<0.000000e+00> : vector<32xf32>
    %81 = vector.multi_reduction <add>, %80, %cst_22 [0] : vector<128x32xf32> to vector<32xf32>
    %82 = vector.shape_cast %81 : vector<32xf32> to vector<1x32xf32>
    %c0_23 = arith.constant 0 : index
    %c0_24 = arith.constant 0 : index
    %83 = vector.load %arg6[%c0_23, %c0_24] : memref<1x32xf32, #tpu.memory_space<vmem>>, vector<1x32xf32>
    tpu.vector_store %arg6[%c0_23, %c0_24], %82 {strides = array<i32>} : memref<1x32xf32, #tpu.memory_space<vmem>>, vector<1x32xf32>,
    %c0_25 = arith.constant 0 : index
    %c0_26 = arith.constant 0 : index
    %84 = vector.load %arg4[%c0_25, %c0_26] : memref<128x32xf32, #tpu.memory_space<vmem>>, vector<128x32xf32>
    tpu.vector_store %arg4[%c0_25, %c0_26], %72 {strides = array<i32>} : memref<128x32xf32, #tpu.memory_space<vmem>>, vector<128x32xf32>,
    %c0_27 = arith.constant 0 : index
    %c0_28 = arith.constant 0 : index
    %85 = vector.load %arg5[%c0_27, %c0_28] : memref<1x128xi32, #tpu.memory_space<vmem>>, vector<1x128xi32>
    %86 = vector.shape_cast %85 : vector<1x128xi32> to vector<128xi32>
    %87 = vector.shape_cast %77 : vector<128xi32> to vector<1x128xi32>
    tpu.vector_store %arg5[%c0_27, %c0_28], %87 {strides = array<i32>} : memref<1x128xi32, #tpu.memory_space<vmem>>, vector<1x128xi32>,
    return
  }
}

</mosaic_0001>

<llo_original>
// kernel: vq_encode.1
$region0: #{vq_encode.1}
  #allocation0 [shape = 'u32[]', space=smem, size = 0x4, offset = 0x4, fixed_abs, tag = 'smem constant byte address 0x4 - core index']
  #allocation1 [shape = 'u32[72,128]{1,0:T(1,128)}', space=vmem, size = 0x9000, scoped, tag = 'internal scratch']
  %s0 = inlined_call_operand.vmem [shape: f32[128,32], index: 0, kind: input, shape index: {}]
  %s1 = inlined_call_operand.vmem [shape: f32[32,32], index: 1, kind: input, shape index: {}]
  %s2 = inlined_call_operand.vmem [shape: f32[1,32], index: 2, kind: input, shape index: {}]
  %s3 = inlined_call_operand.vmem [shape: f32[256,32], index: 3, kind: input, shape index: {}]
  %s4 = inlined_call_operand.vmem [shape: f32[128,32], index: 4, kind: output, shape index: {0}]
  %s5 = inlined_call_operand.vmem [shape: s32[1,128], index: 5, kind: output, shape index: {1}]
  %s6 = inlined_call_operand.vmem [shape: f32[1,32], index: 6, kind: output, shape index: {2}]
  %7 = xla_tuple %s4, %s5, %s6
  %s8 = sld [smem:[#allocation0]]
  $region42: #{vq_encode.1} parent=0
    _
  %s10 = ssub.s32 1, %s8
  %s11 = scalar_select 0, %s10, %s8
  // Predicated region
  $region2: #{vq_encode.1} parent=0 // pred_check
    _
  $region3: #{vq_encode.1} parent=0 // pred_check_branch
    %13 = sbr.rel (0) target = $region5
  $region4: #{vq_encode.1} parent=0 // pred_region
    _
  $region5: #{vq_encode.1} parent=0 // pred_fallthru
    _
  // Predicated region
  $region6: #{vq_encode.1} parent=0 // pred_check
    _
  $region7: #{vq_encode.1} parent=0 // pred_check_branch
    %15 = sbr.rel (0) target = $region9
  $region8: #{vq_encode.1} parent=0 // pred_region
    _
  $region9: #{vq_encode.1} parent=0 // pred_fallthru
    _
  // Predicated region
  $region10: #{vq_encode.1} parent=0 // pred_check
    _
  $region11: #{vq_encode.1} parent=0 // pred_check_branch
    %17 = sbr.rel (0) target = $region13
  $region12: #{vq_encode.1} parent=0 // pred_region
    _
  $region13: #{vq_encode.1} parent=0 // pred_fallthru
    _
  // Predicated region
  $region14: #{vq_encode.1} parent=0 // pred_check
    _
  $region15: #{vq_encode.1} parent=0 // pred_check_branch
    %19 = sbr.rel (0) target = $region17
  $region16: #{vq_encode.1} parent=0 // pred_region
    _
  $region17: #{vq_encode.1} parent=0 // pred_fallthru
    _
  %v20 = vld [vmem:[%s0] sm:$0xff]
  %v21 = vld [vmem:[%s0 + $0x8] sm:$0xff]
  %v22 = vld [vmem:[%s0 + $0x10] sm:$0xff]
  %v23 = vld [vmem:[%s0 + $0x18] sm:$0xff]
  %v24 = vld [vmem:[%s0 + $0x20] sm:$0xff]
  %v25 = vld [vmem:[%s0 + $0x28] sm:$0xff]
  %v26 = vld [vmem:[%s0 + $0x30] sm:$0xff]
  %v27 = vld [vmem:[%s0 + $0x38] sm:$0xff]
  %v28 = vld [vmem:[%s0 + $0x40] sm:$0xff]
  %v29 = vld [vmem:[%s0 + $0x48] sm:$0xff]
  %v30 = vld [vmem:[%s0 + $0x50] sm:$0xff]
  %v31 = vld [vmem:[%s0 + $0x58] sm:$0xff]
  %v32 = vld [vmem:[%s0 + $0x60] sm:$0xff]
  %v33 = vld [vmem:[%s0 + $0x68] sm:$0xff]
  %v34 = vld [vmem:[%s0 + $0x70] sm:$0xff]
  %v35 = vld [vmem:[%s0 + $0x78] sm:$0xff]
  %v36 = vld [vmem:[%s1] sm:$0xff]
  %v37 = vld [vmem:[%s1 + $0x8] sm:$0xff]
  %v38 = vld [vmem:[%s1 + $0x10] sm:$0xff]
  %v39 = vld [vmem:[%s1 + $0x18] sm:$0xff]
  %v40 = vld [vmem:[%s2] sm:$0x1]
  %v42 = vperm.slane %v40, 0
  %vm44 = vcmask 261120
  %v46 = vsel %vm44, %v20, 0
  %v49 = vsel %vm44, %v21, 0
  %v52 = vsel %vm44, %v22, 0
  %v55 = vsel %vm44, %v23, 0
  %v58 = vsel %vm44, %v24, 0
  %v61 = vsel %vm44, %v25, 0
  %v64 = vsel %vm44, %v26, 0
  %v67 = vsel %vm44, %v27, 0
  %v70 = vsel %vm44, %v28, 0
  %v73 = vsel %vm44, %v29, 0
  %v76 = vsel %vm44, %v30, 0
  %v79 = vsel %vm44, %v31, 0
  %v82 = vsel %vm44, %v32, 0
  %v85 = vsel %vm44, %v33, 0
  %v88 = vsel %vm44, %v34, 0
  %v91 = vsel %vm44, %v35, 0
  %93 = vmatpush.msra.mxu0 0.0
  %94 = vmatpush.msra.mxu0 0.0
  %95 = vmatpush.msra.mxu0 0.0
  %96 = vmatpush.msra.mxu0 0.0
  %97 = vmatpush.msra.mxu0 0.0
  %98 = vmatpush.msra.mxu0 0.0
  %99 = vmatpush.msra.mxu0 0.0
  %100 = vmatpush.msra.mxu0 0.0
  %101 = vmatpush.msra.mxu0 0.0
  %102 = vmatpush.msra.mxu0 0.0
  %103 = vmatpush.msra.mxu0 0.0
  %104 = vmatpush.msra.mxu0 0.0
  %105 = vmatpush.msra.mxu0 %v39
  %106 = vmatpush.msra.mxu0 %v38
  %107 = vmatpush.msra.mxu0 %v37
  %108 = vmatpush.msra.mxu0 %v36
  %109 = vmatmul.f32.gmra.mxu0 %v46
  %v110 = vpop.f32.mrf.mxu0
  %v111 = vadd.f32 %v42, %v110
  %112 = vmatmul.f32.gmra.mxu0 %v49
  %v113 = vpop.f32.mrf.mxu0
  %v114 = vadd.f32 %v42, %v113
  %115 = vmatmul.f32.gmra.mxu0 %v52
  %v116 = vpop.f32.mrf.mxu0
  %v117 = vadd.f32 %v42, %v116
  %118 = vmatmul.f32.gmra.mxu0 %v55
  %v119 = vpop.f32.mrf.mxu0
  %v120 = vadd.f32 %v42, %v119
  %121 = vmatmul.f32.gmra.mxu0 %v58
  %v122 = vpop.f32.mrf.mxu0
  %v123 = vadd.f32 %v42, %v122
  %124 = vmatmul.f32.gmra.mxu0 %v61
  %v125 = vpop.f32.mrf.mxu0
  %v126 = vadd.f32 %v42, %v125
  %127 = vmatmul.f32.gmra.mxu0 %v64
  %v128 = vpop.f32.mrf.mxu0
  %v129 = vadd.f32 %v42, %v128
  %130 = vmatmul.f32.gmra.mxu0 %v67
  %v131 = vpop.f32.mrf.mxu0
  %v132 = vadd.f32 %v42, %v131
  %133 = vmatmul.f32.gmra.mxu0 %v70
  %v134 = vpop.f32.mrf.mxu0
  %v135 = vadd.f32 %v42, %v134
  %136 = vmatmul.f32.gmra.mxu0 %v73
  %v137 = vpop.f32.mrf.mxu0
  %v138 = vadd.f32 %v42, %v137
  %139 = vmatmul.f32.gmra.mxu0 %v76
  %v140 = vpop.f32.mrf.mxu0
  %v141 = vadd.f32 %v42, %v140
  %142 = vmatmul.f32.gmra.mxu0 %v79
  %v143 = vpop.f32.mrf.mxu0
  %v144 = vadd.f32 %v42, %v143
  %145 = vmatmul.f32.gmra.mxu0 %v82
  %v146 = vpop.f32.mrf.mxu0
  %v147 = vadd.f32 %v42, %v146
  %148 = vmatmul.f32.gmra.mxu0 %v85
  %v149 = vpop.f32.mrf.mxu0
  %v150 = vadd.f32 %v42, %v149
  %151 = vmatmul.f32.gmra.mxu0 %v88
  %v152 = vpop.f32.mrf.mxu0
  %v153 = vadd.f32 %v42, %v152
  %154 = vmatmul.f32.gmra.mxu0 %v91
  %v155 = vpop.f32.mrf.mxu0
  %v156 = vadd.f32 %v42, %v155
  %157 = vdwg.mxu0
  %v158 = vmul.f32 %v111, %v111
  %v159 = vmul.f32 %v114, %v114
  %v160 = vmul.f32 %v117, %v117
  %v161 = vmul.f32 %v120, %v120
  %v162 = vmul.f32 %v123, %v123
  %v163 = vmul.f32 %v126, %v126
  %v164 = vmul.f32 %v129, %v129
  %v165 = vmul.f32 %v132, %v132
  %v166 = vmul.f32 %v135, %v135
  %v167 = vmul.f32 %v138, %v138
  %v168 = vmul.f32 %v141, %v141
  %v169 = vmul.f32 %v144, %v144
  %v170 = vmul.f32 %v147, %v147
  %v171 = vmul.f32 %v150, %v150
  %v172 = vmul.f32 %v153, %v153
  %v173 = vmul.f32 %v156, %v156
  %v174 = vsel %vm44, %v158, 0.0
  %v175 = vsel %vm44, %v159, 0.0
  %v176 = vadd.f32 %v174, %v175
  %v177 = vsel %vm44, %v160, 0.0
  %v178 = vadd.f32 %v176, %v177
  %v179 = vsel %vm44, %v161, 0.0
  %v180 = vadd.f32 %v178, %v179
  %v181 = vsel %vm44, %v162, 0.0
  %v182 = vadd.f32 %v180, %v181
  %v183 = vsel %vm44, %v163, 0.0
  %v184 = vadd.f32 %v182, %v183
  %v185 = vsel %vm44, %v164, 0.0
  %v186 = vadd.f32 %v184, %v185
  %v187 = vsel %vm44, %v165, 0.0
  %v188 = vadd.f32 %v186, %v187
  %v189 = vrot.slane %v188, 4
  %v190 = vadd.f32 %v188, %v189
  %v191 = vrot.slane %v190, 2
  %v192 = vadd.f32 %v190, %v191
  %v193 = vrot.slane %v192, 1
  %v194 = vadd.f32 %v192, %v193
  %v195 = vsel %vm44, %v166, 0.0
  %v196 = vsel %vm44, %v167, 0.0
  %v197 = vadd.f32 %v195, %v196
  %v198 = vsel %vm44, %v168, 0.0
  %v199 = vadd.f32 %v197, %v198
  %v200 = vsel %vm44, %v169, 0.0
  %v201 = vadd.f32 %v199, %v200
  %v202 = vsel %vm44, %v170, 0.0
  %v203 = vadd.f32 %v201, %v202
  %v204 = vsel %vm44, %v171, 0.0
  %v205 = vadd.f32 %v203, %v204
  %v206 = vsel %vm44, %v172, 0.0
  %v207 = vadd.f32 %v205, %v206
  %v208 = vsel %vm44, %v173, 0.0
  %v209 = vadd.f32 %v207, %v208
  %v210 = vrot.slane %v209, 4
  %v211 = vadd.f32 %v209, %v210
  %v212 = vrot.slane %v211, 2
  %v213 = vadd.f32 %v211, %v212
  %v214 = vrot.slane %v213, 1
  %v215 = vadd.f32 %v213, %v214
  %v216 = vrsqrt.pop %v194
  %v217 = vmul.f32 %v216, %v194
  %v218 = vmul.f32 %v217, %v216
  %v219 = vmul.f32 0.5, %v218
  %v220 = vsub.f32 1.5, %v219
  %v221 = vmul.f32 %v216, %v220
  %vm222 = vweird.f32 %v194
  %vm223 = vweird.f32 %v216
  %vm224 = vmor %vm222, %vm223
  %v225 = vsel %vm224, %v216, %v221
  %v226 = vrsqrt.pop %v215
  %v227 = vmul.f32 %v226, %v215
  %v228 = vmul.f32 %v227, %v226
  %v229 = vmul.f32 0.5, %v228
  %v230 = vsub.f32 1.5, %v229
  %v231 = vmul.f32 %v226, %v230
  %vm232 = vweird.f32 %v215
  %vm233 = vweird.f32 %v226
  %vm234 = vmor %vm232, %vm233
  %v235 = vsel %vm234, %v226, %v231
  %v236 = vmul.f32 %v111, %v225
  %v237 = vmul.f32 %v114, %v225
  %v238 = vmul.f32 %v117, %v225
  %v239 = vmul.f32 %v120, %v225
  %v240 = vmul.f32 %v123, %v225
  %v241 = vmul.f32 %v126, %v225
  %v242 = vmul.f32 %v129, %v225
  %v243 = vmul.f32 %v132, %v225
  %v244 = vmul.f32 %v135, %v235
  %v245 = vmul.f32 %v138, %v235
  %v246 = vmul.f32 %v141, %v235
  %v247 = vmul.f32 %v144, %v235
  %v248 = vmul.f32 %v147, %v235
  %v249 = vmul.f32 %v150, %v235
  %v250 = vmul.f32 %v153, %v235
  %v251 = vmul.f32 %v156, %v235
  %v252 = vmul.f32 %v236, %v236
  %v253 = vmul.f32 %v237, %v237
  %v254 = vmul.f32 %v238, %v238
  %v255 = vmul.f32 %v239, %v239
  %v256 = vmul.f32 %v240, %v240
  %v257 = vmul.f32 %v241, %v241
  %v258 = vmul.f32 %v242, %v242
  %v259 = vmul.f32 %v243, %v243
  %v260 = vmul.f32 %v244, %v244
  %v261 = vmul.f32 %v245, %v245
  %v262 = vmul.f32 %v246, %v246
  %v263 = vmul.f32 %v247, %v247
  %v264 = vmul.f32 %v248, %v248
  %v265 = vmul.f32 %v249, %v249
  %v266 = vmul.f32 %v250, %v250
  %v267 = vmul.f32 %v251, %v251
  %v268 = vsel %vm44, %v252, 0.0
  %269 = vadd.xlane.f32.xlu0 %v268
  %v270 = vpop.xlane.xlu0 %269
  %v271 = vsel %vm44, %v253, 0.0
  %272 = vadd.xlane.f32.xlu0 %v271
  %v273 = vpop.xlane.xlu0 %272
  %v274 = vsel %vm44, %v254, 0.0
  %275 = vadd.xlane.f32.xlu0 %v274
  %v276 = vpop.xlane.xlu0 %275
  %v277 = vsel %vm44, %v255, 0.0
  %278 = vadd.xlane.f32.xlu0 %v277
  %v279 = vpop.xlane.xlu0 %278
  %v280 = vsel %vm44, %v256, 0.0
  %281 = vadd.xlane.f32.xlu0 %v280
  %v282 = vpop.xlane.xlu0 %281
  %v283 = vsel %vm44, %v257, 0.0
  %284 = vadd.xlane.f32.xlu0 %v283
  %v285 = vpop.xlane.xlu0 %284
  %v286 = vsel %vm44, %v258, 0.0
  %287 = vadd.xlane.f32.xlu0 %v286
  %v288 = vpop.xlane.xlu0 %287
  %v289 = vsel %vm44, %v259, 0.0
  %290 = vadd.xlane.f32.xlu0 %v289
  %v291 = vpop.xlane.xlu0 %290
  %v292 = vsel %vm44, %v260, 0.0
  %293 = vadd.xlane.f32.xlu0 %v292
  %v294 = vpop.xlane.xlu0 %293
  %v295 = vsel %vm44, %v261, 0.0
  %296 = vadd.xlane.f32.xlu0 %v295
  %v297 = vpop.xlane.xlu0 %296
  %v298 = vsel %vm44, %v262, 0.0
  %299 = vadd.xlane.f32.xlu0 %v298
  %v300 = vpop.xlane.xlu0 %299
  %v301 = vsel %vm44, %v263, 0.0
  %302 = vadd.xlane.f32.xlu0 %v301
  %v303 = vpop.xlane.xlu0 %302
  %v304 = vsel %vm44, %v264, 0.0
  %305 = vadd.xlane.f32.xlu0 %v304
  %v306 = vpop.xlane.xlu0 %305
  %v307 = vsel %vm44, %v265, 0.0
  %308 = vadd.xlane.f32.xlu0 %v307
  %v309 = vpop.xlane.xlu0 %308
  %v310 = vsel %vm44, %v266, 0.0
  %311 = vadd.xlane.f32.xlu0 %v310
  %v312 = vpop.xlane.xlu0 %311
  %v313 = vsel %vm44, %v267, 0.0
  %314 = vadd.xlane.f32.xlu0 %v313
  %v315 = vpop.xlane.xlu0 %314
  %v316 = vmax.f32 %v270, 1e-24
  %v317 = vmax.f32 %v273, 1e-24
  %v318 = vmax.f32 %v276, 1e-24
  %v319 = vmax.f32 %v279, 1e-24
  %v320 = vmax.f32 %v282, 1e-24
  %v321 = vmax.f32 %v285, 1e-24
  %v322 = vmax.f32 %v288, 1e-24
  %v323 = vmax.f32 %v291, 1e-24
  %v324 = vmax.f32 %v294, 1e-24
  %v325 = vmax.f32 %v297, 1e-24
  %v326 = vmax.f32 %v300, 1e-24
  %v327 = vmax.f32 %v303, 1e-24
  %v328 = vmax.f32 %v306, 1e-24
  %v329 = vmax.f32 %v309, 1e-24
  %v330 = vmax.f32 %v312, 1e-24
  %v331 = vmax.f32 %v315, 1e-24
  %v332 = vrsqrt.pop %v316
  %v333 = vmul.f32 %v332, %v316
  %v334 = vmul.f32 %v333, %v332
  %v335 = vmul.f32 0.5, %v334
  %v336 = vsub.f32 1.5, %v335
  %v337 = vmul.f32 %v332, %v336
  %vm338 = vweird.f32 %v316
  %vm339 = vweird.f32 %v332
  %vm340 = vmor %vm338, %vm339
  %v341 = vsel %vm340, %v332, %v337
  %v342 = vrsqrt.pop %v317
  %v343 = vmul.f32 %v342, %v317
  %v344 = vmul.f32 %v343, %v342
  %v345 = vmul.f32 0.5, %v344
  %v346 = vsub.f32 1.5, %v345
  %v347 = vmul.f32 %v342, %v346
  %vm348 = vweird.f32 %v317
  %vm349 = vweird.f32 %v342
  %vm350 = vmor %vm348, %vm349
  %v351 = vsel %vm350, %v342, %v347
  %v352 = vrsqrt.pop %v318
  %v353 = vmul.f32 %v352, %v318
  %v354 = vmul.f32 %v353, %v352
  %v355 = vmul.f32 0.5, %v354
  %v356 = vsub.f32 1.5, %v355
  %v357 = vmul.f32 %v352, %v356
  %vm358 = vweird.f32 %v318
  %vm359 = vweird.f32 %v352
  %vm360 = vmor %vm358, %vm359
  %v361 = vsel %vm360, %v352, %v357
  %v362 = vrsqrt.pop %v319
  %v363 = vmul.f32 %v362, %v319
  %v364 = vmul.f32 %v363, %v362
  %v365 = vmul.f32 0.5, %v364
  %v366 = vsub.f32 1.5, %v365
  %v367 = vmul.f32 %v362, %v366
  %vm368 = vweird.f32 %v319
  %vm369 = vweird.f32 %v362
  %vm370 = vmor %vm368, %vm369
  %v371 = vsel %vm370, %v362, %v367
  %v372 = vrsqrt.pop %v320
  %v373 = vmul.f32 %v372, %v320
  %v374 = vmul.f32 %v373, %v372
  %v375 = vmul.f32 0.5, %v374
  %v376 = vsub.f32 1.5, %v375
  %v377 = vmul.f32 %v372, %v376
  %vm378 = vweird.f32 %v320
  %vm379 = vweird.f32 %v372
  %vm380 = vmor %vm378, %vm379
  %v381 = vsel %vm380, %v372, %v377
  %v382 = vrsqrt.pop %v321
  %v383 = vmul.f32 %v382, %v321
  %v384 = vmul.f32 %v383, %v382
  %v385 = vmul.f32 0.5, %v384
  %v386 = vsub.f32 1.5, %v385
  %v387 = vmul.f32 %v382, %v386
  %vm388 = vweird.f32 %v321
  %vm389 = vweird.f32 %v382
  %vm390 = vmor %vm388, %vm389
  %v391 = vsel %vm390, %v382, %v387
  %v392 = vrsqrt.pop %v322
  %v393 = vmul.f32 %v392, %v322
  %v394 = vmul.f32 %v393, %v392
  %v395 = vmul.f32 0.5, %v394
  %v396 = vsub.f32 1.5, %v395
  %v397 = vmul.f32 %v392, %v396
  %vm398 = vweird.f32 %v322
  %vm399 = vweird.f32 %v392
  %vm400 = vmor %vm398, %vm399
  %v401 = vsel %vm400, %v392, %v397
  %v402 = vrsqrt.pop %v323
  %v403 = vmul.f32 %v402, %v323
  %v404 = vmul.f32 %v403, %v402
  %v405 = vmul.f32 0.5, %v404
  %v406 = vsub.f32 1.5, %v405
  %v407 = vmul.f32 %v402, %v406
  %vm408 = vweird.f32 %v323
  %vm409 = vweird.f32 %v402
  %vm410 = vmor %vm408, %vm409
  %v411 = vsel %vm410, %v402, %v407
  %v412 = vrsqrt.pop %v324
  %v413 = vmul.f32 %v412, %v324
  %v414 = vmul.f32 %v413, %v412
  %v415 = vmul.f32 0.5, %v414
  %v416 = vsub.f32 1.5, %v415
  %v417 = vmul.f32 %v412, %v416
  %vm418 = vweird.f32 %v324
  %vm419 = vweird.f32 %v412
  %vm420 = vmor %vm418, %vm419
  %v421 = vsel %vm420, %v412, %v417
  %v422 = vrsqrt.pop %v325
  %v423 = vmul.f32 %v422, %v325
  %v424 = vmul.f32 %v423, %v422
  %v425 = vmul.f32 0.5, %v424
  %v426 = vsub.f32 1.5, %v425
  %v427 = vmul.f32 %v422, %v426
  %vm428 = vweird.f32 %v325
  %vm429 = vweird.f32 %v422
  %vm430 = vmor %vm428, %vm429
  %v431 = vsel %vm430, %v422, %v427
  %v432 = vrsqrt.pop %v326
  %v433 = vmul.f32 %v432, %v326
  %v434 = vmul.f32 %v433, %v432
  %v435 = vmul.f32 0.5, %v434
  %v436 = vsub.f32 1.5, %v435
  %v437 = vmul.f32 %v432, %v436
  %vm438 = vweird.f32 %v326
  %vm439 = vweird.f32 %v432
  %vm440 = vmor %vm438, %vm439
  %v441 = vsel %vm440, %v432, %v437
  %v442 = vrsqrt.pop %v327
  %v443 = vmul.f32 %v442, %v327
  %v444 = vmul.f32 %v443, %v442
  %v445 = vmul.f32 0.5, %v444
  %v446 = vsub.f32 1.5, %v445
  %v447 = vmul.f32 %v442, %v446
  %vm448 = vweird.f32 %v327
  %vm449 = vweird.f32 %v442
  %vm450 = vmor %vm448, %vm449
  %v451 = vsel %vm450, %v442, %v447
  %v452 = vrsqrt.pop %v328
  %v453 = vmul.f32 %v452, %v328
  %v454 = vmul.f32 %v453, %v452
  %v455 = vmul.f32 0.5, %v454
  %v456 = vsub.f32 1.5, %v455
  %v457 = vmul.f32 %v452, %v456
  %vm458 = vweird.f32 %v328
  %vm459 = vweird.f32 %v452
  %vm460 = vmor %vm458, %vm459
  %v461 = vsel %vm460, %v452, %v457
  %v462 = vrsqrt.pop %v329
  %v463 = vmul.f32 %v462, %v329
  %v464 = vmul.f32 %v463, %v462
  %v465 = vmul.f32 0.5, %v464
  %v466 = vsub.f32 1.5, %v465
  %v467 = vmul.f32 %v462, %v466
  %vm468 = vweird.f32 %v329
  %vm469 = vweird.f32 %v462
  %vm470 = vmor %vm468, %vm469
  %v471 = vsel %vm470, %v462, %v467
  %v472 = vrsqrt.pop %v330
  %v473 = vmul.f32 %v472, %v330
  %v474 = vmul.f32 %v473, %v472
  %v475 = vmul.f32 0.5, %v474
  %v476 = vsub.f32 1.5, %v475
  %v477 = vmul.f32 %v472, %v476
  %vm478 = vweird.f32 %v330
  %vm479 = vweird.f32 %v472
  %vm480 = vmor %vm478, %vm479
  %v481 = vsel %vm480, %v472, %v477
  %v482 = vrsqrt.pop %v331
  %v483 = vmul.f32 %v482, %v331
  %v484 = vmul.f32 %v483, %v482
  %v485 = vmul.f32 0.5, %v484
  %v486 = vsub.f32 1.5, %v485
  %v487 = vmul.f32 %v482, %v486
  %vm488 = vweird.f32 %v331
  %vm489 = vweird.f32 %v482
  %vm490 = vmor %vm488, %vm489
  %v491 = vsel %vm490, %v482, %v487
  %v492 = vmul.f32 %v236, %v341
  %v493 = vmul.f32 %v237, %v351
  %v494 = vmul.f32 %v238, %v361
  %v495 = vmul.f32 %v239, %v371
  %v496 = vmul.f32 %v240, %v381
  %v497 = vmul.f32 %v241, %v391
  %v498 = vmul.f32 %v242, %v401
  %v499 = vmul.f32 %v243, %v411
  %v500 = vmul.f32 %v244, %v421
  %v501 = vmul.f32 %v245, %v431
  %v502 = vmul.f32 %v246, %v441
  %v503 = vmul.f32 %v247, %v451
  %v504 = vmul.f32 %v248, %v461
  %v505 = vmul.f32 %v249, %v471
  %v506 = vmul.f32 %v250, %v481
  %v507 = vmul.f32 %v251, %v491
  %v508 = vld [vmem:[%s3] sm:$0xff]
  %v509 = vld [vmem:[%s3 + $0x8] sm:$0xff]
  %v510 = vld [vmem:[%s3 + $0x10] sm:$0xff]
  %v511 = vld [vmem:[%s3 + $0x18] sm:$0xff]
  %v512 = vld [vmem:[%s3 + $0x20] sm:$0xff]
  %v513 = vld [vmem:[%s3 + $0x28] sm:$0xff]
  %v514 = vld [vmem:[%s3 + $0x30] sm:$0xff]
  %v515 = vld [vmem:[%s3 + $0x38] sm:$0xff]
  %v516 = vld [vmem:[%s3 + $0x40] sm:$0xff]
  %v517 = vld [vmem:[%s3 + $0x48] sm:$0xff]
  %v518 = vld [vmem:[%s3 + $0x50] sm:$0xff]
  %v519 = vld [vmem:[%s3 + $0x58] sm:$0xff]
  %v520 = vld [vmem:[%s3 + $0x60] sm:$0xff]
  %v521 = vld [vmem:[%s3 + $0x68] sm:$0xff]
  %v522 = vld [vmem:[%s3 + $0x70] sm:$0xff]
  %v523 = vld [vmem:[%s3 + $0x78] sm:$0xff]
  %v525 = vsel %vm44, %v492, 0
  %v528 = vsel %vm44, %v493, 0
  %v531 = vsel %vm44, %v494, 0
  %v534 = vsel %vm44, %v495, 0
  %v537 = vsel %vm44, %v496, 0
  %v540 = vsel %vm44, %v497, 0
  %v543 = vsel %vm44, %v498, 0
  %v546 = vsel %vm44, %v499, 0
  %v549 = vsel %vm44, %v500, 0
  %v552 = vsel %vm44, %v501, 0
  %v555 = vsel %vm44, %v502, 0
  %v558 = vsel %vm44, %v503, 0
  %v561 = vsel %vm44, %v504, 0
  %v564 = vsel %vm44, %v505, 0
  %v567 = vsel %vm44, %v506, 0
  %v570 = vsel %vm44, %v507, 0
  %v573 = vsel %vm44, %v508, 0
  %v576 = vsel %vm44, %v509, 0
  %v579 = vsel %vm44, %v510, 0
  %v582 = vsel %vm44, %v511, 0
  %v585 = vsel %vm44, %v512, 0
  %v588 = vsel %vm44, %v513, 0
  %v591 = vsel %vm44, %v514, 0
  %v594 = vsel %vm44, %v515, 0
  %v597 = vsel %vm44, %v516, 0
  %v600 = vsel %vm44, %v517, 0
  %v603 = vsel %vm44, %v518, 0
  %v606 = vsel %vm44, %v519, 0
  %v609 = vsel %vm44, %v520, 0
  %v612 = vsel %vm44, %v521, 0
  %v615 = vsel %vm44, %v522, 0
  %v618 = vsel %vm44, %v523, 0
  %620 = vmatpush.xpose.msra.mxu0 %v618
  %621 = vmatpush.xpose.msra.mxu0 %v615
  %622 = vmatpush.xpose.msra.mxu0 %v612
  %623 = vmatpush.xpose.msra.mxu0 %v609
  %624 = vmatpush.xpose.msra.mxu0 %v606
  %625 = vmatpush.xpose.msra.mxu0 %v603
  %626 = vmatpush.xpose.msra.mxu0 %v600
  %627 = vmatpush.xpose.msra.mxu0 %v597
  %628 = vmatpush.xpose.msra.mxu0 %v594
  %629 = vmatpush.xpose.msra.mxu0 %v591
  %630 = vmatpush.xpose.msra.mxu0 %v588
  %631 = vmatpush.xpose.msra.mxu0 %v585
  %632 = vmatpush.xpose.msra.mxu0 %v582
  %633 = vmatpush.xpose.msra.mxu0 %v579
  %634 = vmatpush.xpose.msra.mxu0 %v576
  %635 = vmatpush.xpose.msra.mxu0 %v573
  %636 = vmatmul.f32.gmra.mxu0 %v525
  %v637 = vpop.f32.mrf.mxu0
  %v638 = vadd.f32 0.0, %v637
  %639 = vmatmul.f32.gmra.mxu0 %v528
  %v640 = vpop.f32.mrf.mxu0
  %v641 = vadd.f32 0.0, %v640
  %642 = vmatmul.f32.gmra.mxu0 %v531
  %v643 = vpop.f32.mrf.mxu0
  %v644 = vadd.f32 0.0, %v643
  %645 = vmatmul.f32.gmra.mxu0 %v534
  %v646 = vpop.f32.mrf.mxu0
  %v647 = vadd.f32 0.0, %v646
  %648 = vmatmul.f32.gmra.mxu0 %v537
  %v649 = vpop.f32.mrf.mxu0
  %v650 = vadd.f32 0.0, %v649
  %651 = vmatmul.f32.gmra.mxu0 %v540
  %v652 = vpop.f32.mrf.mxu0
  %v653 = vadd.f32 0.0, %v652
  %654 = vmatmul.f32.gmra.mxu0 %v543
  %v655 = vpop.f32.mrf.mxu0
  %v656 = vadd.f32 0.0, %v655
  %657 = vmatmul.f32.gmra.mxu0 %v546
  %v658 = vpop.f32.mrf.mxu0
  %v659 = vadd.f32 0.0, %v658
  %660 = vmatmul.f32.gmra.mxu0 %v549
  %v661 = vpop.f32.mrf.mxu0
  %v662 = vadd.f32 0.0, %v661
  %663 = vmatmul.f32.gmra.mxu0 %v552
  %v664 = vpop.f32.mrf.mxu0
  %v665 = vadd.f32 0.0, %v664
  %666 = vmatmul.f32.gmra.mxu0 %v555
  %v667 = vpop.f32.mrf.mxu0
  %v668 = vadd.f32 0.0, %v667
  %669 = vmatmul.f32.gmra.mxu0 %v558
  %v670 = vpop.f32.mrf.mxu0
  %v671 = vadd.f32 0.0, %v670
  %672 = vmatmul.f32.gmra.mxu0 %v561
  %v673 = vpop.f32.mrf.mxu0
  %v674 = vadd.f32 0.0, %v673
  %675 = vmatmul.f32.gmra.mxu0 %v564
  %v676 = vpop.f32.mrf.mxu0
  %v677 = vadd.f32 0.0, %v676
  %678 = vmatmul.f32.gmra.mxu0 %v567
  %v679 = vpop.f32.mrf.mxu0
  %v680 = vadd.f32 0.0, %v679
  %681 = vmatmul.f32.gmra.mxu0 %v570
  %v682 = vpop.f32.mrf.mxu0
  %v683 = vadd.f32 0.0, %v682
  %684 = vdwg.mxu0
  %685 = vmax.xlane.f32.xlu0 %v638
  %v686 = vpop.xlane.xlu0 %685
  %687 = vmax.xlane.f32.xlu0 %v641
  %v688 = vpop.xlane.xlu0 %687
  %689 = vmax.xlane.f32.xlu0 %v644
  %v690 = vpop.xlane.xlu0 %689
  %691 = vmax.xlane.f32.xlu0 %v647
  %v692 = vpop.xlane.xlu0 %691
  %693 = vmax.xlane.f32.xlu0 %v650
  %v694 = vpop.xlane.xlu0 %693
  %695 = vmax.xlane.f32.xlu0 %v653
  %v696 = vpop.xlane.xlu0 %695
  %697 = vmax.xlane.f32.xlu0 %v656
  %v698 = vpop.xlane.xlu0 %697
  %699 = vmax.xlane.f32.xlu0 %v659
  %v700 = vpop.xlane.xlu0 %699
  %701 = vmax.xlane.f32.xlu0 %v662
  %v702 = vpop.xlane.xlu0 %701
  %703 = vmax.xlane.f32.xlu0 %v665
  %v704 = vpop.xlane.xlu0 %703
  %705 = vmax.xlane.f32.xlu0 %v668
  %v706 = vpop.xlane.xlu0 %705
  %707 = vmax.xlane.f32.xlu0 %v671
  %v708 = vpop.xlane.xlu0 %707
  %709 = vmax.xlane.f32.xlu0 %v674
  %v710 = vpop.xlane.xlu0 %709
  %711 = vmax.xlane.f32.xlu0 %v677
  %v712 = vpop.xlane.xlu0 %711
  %713 = vmax.xlane.f32.xlu0 %v680
  %v714 = vpop.xlane.xlu0 %713
  %715 = vmax.xlane.f32.xlu0 %v683
  %v716 = vpop.xlane.xlu0 %715
  %717 = vmax.index.xlane.f32.xlu0 %v638
  %v718 = vpop.xlane.xlu0 %717
  %719 = vmax.index.xlane.f32.xlu0 %v641
  %v720 = vpop.xlane.xlu0 %719
  %721 = vmax.index.xlane.f32.xlu0 %v644
  %v722 = vpop.xlane.xlu0 %721
  %723 = vmax.index.xlane.f32.xlu0 %v647
  %v724 = vpop.xlane.xlu0 %723
  %725 = vmax.index.xlane.f32.xlu0 %v650
  %v726 = vpop.xlane.xlu0 %725
  %727 = vmax.index.xlane.f32.xlu0 %v653
  %v728 = vpop.xlane.xlu0 %727
  %729 = vmax.index.xlane.f32.xlu0 %v656
  %v730 = vpop.xlane.xlu0 %729
  %731 = vmax.index.xlane.f32.xlu0 %v659
  %v732 = vpop.xlane.xlu0 %731
  %733 = vmax.index.xlane.f32.xlu0 %v662
  %v734 = vpop.xlane.xlu0 %733
  %735 = vmax.index.xlane.f32.xlu0 %v665
  %v736 = vpop.xlane.xlu0 %735
  %737 = vmax.index.xlane.f32.xlu0 %v668
  %v738 = vpop.xlane.xlu0 %737
  %739 = vmax.index.xlane.f32.xlu0 %v671
  %v740 = vpop.xlane.xlu0 %739
  %741 = vmax.index.xlane.f32.xlu0 %v674
  %v742 = vpop.xlane.xlu0 %741
  %743 = vmax.index.xlane.f32.xlu0 %v677
  %v744 = vpop.xlane.xlu0 %743
  %745 = vmax.index.xlane.f32.xlu0 %v680
  %v746 = vpop.xlane.xlu0 %745
  %747 = vmax.index.xlane.f32.xlu0 %v683
  %v748 = vpop.xlane.xlu0 %747
  %vm749 = vcmp.gt.f32.partialorder %v686, -inf
  %vm750 = vcmp.gt.f32.partialorder %v688, -inf
  %vm751 = vcmp.gt.f32.partialorder %v690, -inf
  %vm752 = vcmp.gt.f32.partialorder %v692, -inf
  %vm753 = vcmp.gt.f32.partialorder %v694, -inf
  %vm754 = vcmp.gt.f32.partialorder %v696, -inf
  %vm755 = vcmp.gt.f32.partialorder %v698, -inf
  %vm756 = vcmp.gt.f32.partialorder %v700, -inf
  %vm757 = vcmp.gt.f32.partialorder %v702, -inf
  %vm758 = vcmp.gt.f32.partialorder %v704, -inf
  %vm759 = vcmp.gt.f32.partialorder %v706, -inf
  %vm760 = vcmp.gt.f32.partialorder %v708, -inf
  %vm761 = vcmp.gt.f32.partialorder %v710, -inf
  %vm762 = vcmp.gt.f32.partialorder %v712, -inf
  %vm763 = vcmp.gt.f32.partialorder %v714, -inf
  %vm764 = vcmp.gt.f32.partialorder %v716, -inf
  %v765 = vlaneseq
  %v766 = vand.u32 %v765, 127
  %vm767 = vcmp.eq.s32.totalorder %v766, %v718
  %vm768 = vcmp.eq.s32.totalorder %v766, %v720
  %vm769 = vcmp.eq.s32.totalorder %v766, %v722
  %vm770 = vcmp.eq.s32.totalorder %v766, %v724
  %vm771 = vcmp.eq.s32.totalorder %v766, %v726
  %vm772 = vcmp.eq.s32.totalorder %v766, %v728
  %vm773 = vcmp.eq.s32.totalorder %v766, %v730
  %vm774 = vcmp.eq.s32.totalorder %v766, %v732
  %vm775 = vcmp.eq.s32.totalorder %v766, %v734
  %vm776 = vcmp.eq.s32.totalorder %v766, %v736
  %vm777 = vcmp.eq.s32.totalorder %v766, %v738
  %vm778 = vcmp.eq.s32.totalorder %v766, %v740
  %vm779 = vcmp.eq.s32.totalorder %v766, %v742
  %vm780 = vcmp.eq.s32.totalorder %v766, %v744
  %vm781 = vcmp.eq.s32.totalorder %v766, %v746
  %vm782 = vcmp.eq.s32.totalorder %v766, %v748
  %v783 = vsel %vm749, 1, 0
  %v784 = vsel %vm750, 1, 0
  %v785 = vsel %vm751, 1, 0
  %v786 = vsel %vm752, 1, 0
  %v787 = vsel %vm753, 1, 0
  %v788 = vsel %vm754, 1, 0
  %v789 = vsel %vm755, 1, 0
  %v790 = vsel %vm756, 1, 0
  %v791 = vsel %vm757, 1, 0
  %v792 = vsel %vm758, 1, 0
  %v793 = vsel %vm759, 1, 0
  %v794 = vsel %vm760, 1, 0
  %v795 = vsel %vm761, 1, 0
  %v796 = vsel %vm762, 1, 0
  %v797 = vsel %vm763, 1, 0
  %v798 = vsel %vm764, 1, 0
  %vm799 = vcmp.eq.s32.totalorder %v783, 1
  %vm800 = vcmp.eq.s32.totalorder %v784, 1
  %vm801 = vcmp.eq.s32.totalorder %v785, 1
  %vm802 = vcmp.eq.s32.totalorder %v786, 1
  %vm803 = vcmp.eq.s32.totalorder %v787, 1
  %vm804 = vcmp.eq.s32.totalorder %v788, 1
  %vm805 = vcmp.eq.s32.totalorder %v789, 1
  %vm806 = vcmp.eq.s32.totalorder %v790, 1
  %vm807 = vcmp.eq.s32.totalorder %v791, 1
  %vm808 = vcmp.eq.s32.totalorder %v792, 1
  %vm809 = vcmp.eq.s32.totalorder %v793, 1
  %vm810 = vcmp.eq.s32.totalorder %v794, 1
  %vm811 = vcmp.eq.s32.totalorder %v795, 1
  %vm812 = vcmp.eq.s32.totalorder %v796, 1
  %vm813 = vcmp.eq.s32.totalorder %v797, 1
  %vm814 = vcmp.eq.s32.totalorder %v798, 1
  %vm815 = vmand %vm767, %vm799
  %vm816 = vmand %vm768, %vm800
  %vm817 = vmand %vm769, %vm801
  %vm818 = vmand %vm770, %vm802
  %vm819 = vmand %vm771, %vm803
  %vm820 = vmand %vm772, %vm804
  %vm821 = vmand %vm773, %vm805
  %vm822 = vmand %vm774, %vm806
  %vm823 = vmand %vm775, %vm807
  %vm824 = vmand %vm776, %vm808
  %vm825 = vmand %vm777, %vm809
  %vm826 = vmand %vm778, %vm810
  %vm827 = vmand %vm779, %vm811
  %vm828 = vmand %vm780, %vm812
  %vm829 = vmand %vm781, %vm813
  %vm830 = vmand %vm782, %vm814
  %v831 = vsel %vm815, 1, 0
  %v832 = vsel %vm816, 1, 0
  %v833 = vsel %vm817, 1, 0
  %v834 = vsel %vm818, 1, 0
  %v835 = vsel %vm819, 1, 0
  %v836 = vsel %vm820, 1, 0
  %v837 = vsel %vm821, 1, 0
  %v838 = vsel %vm822, 1, 0
  %v839 = vsel %vm823, 1, 0
  %v840 = vsel %vm824, 1, 0
  %v841 = vsel %vm825, 1, 0
  %v842 = vsel %vm826, 1, 0
  %v843 = vsel %vm827, 1, 0
  %v844 = vsel %vm828, 1, 0
  %v845 = vsel %vm829, 1, 0
  %v846 = vsel %vm830, 1, 0
  %v847 = vcvt.s32.f32 %v831
  %v848 = vcvt.s32.f32 %v832
  %v849 = vcvt.s32.f32 %v833
  %v850 = vcvt.s32.f32 %v834
  %v851 = vcvt.s32.f32 %v835
  %v852 = vcvt.s32.f32 %v836
  %v853 = vcvt.s32.f32 %v837
  %v854 = vcvt.s32.f32 %v838
  %v855 = vcvt.s32.f32 %v839
  %v856 = vcvt.s32.f32 %v840
  %v857 = vcvt.s32.f32 %v841
  %v858 = vcvt.s32.f32 %v842
  %v859 = vcvt.s32.f32 %v843
  %v860 = vcvt.s32.f32 %v844
  %v861 = vcvt.s32.f32 %v845
  %v862 = vcvt.s32.f32 %v846
  %863 = vmatpush.msra.mxu0 %v523
  %864 = vmatpush.msra.mxu0 %v522
  %865 = vmatpush.msra.mxu0 %v521
  %866 = vmatpush.msra.mxu0 %v520
  %867 = vmatpush.msra.mxu0 %v519
  %868 = vmatpush.msra.mxu0 %v518
  %869 = vmatpush.msra.mxu0 %v517
  %870 = vmatpush.msra.mxu0 %v516
  %871 = vmatpush.msra.mxu0 %v515
  %872 = vmatpush.msra.mxu0 %v514
  %873 = vmatpush.msra.mxu0 %v513
  %874 = vmatpush.msra.mxu0 %v512
  %875 = vmatpush.msra.mxu0 %v511
  %876 = vmatpush.msra.mxu0 %v510
  %877 = vmatpush.msra.mxu0 %v509
  %878 = vmatpush.msra.mxu0 %v508
  %879 = vmatmul.f32.gmra.mxu0 %v847
  %v880 = vpop.f32.mrf.mxu0
  %v881 = vadd.f32 0.0, %v880
  %882 = vmatmul.f32.gmra.mxu0 %v848
  %v883 = vpop.f32.mrf.mxu0
  %v884 = vadd.f32 0.0, %v883
  %885 = vmatmul.f32.gmra.mxu0 %v849
  %v886 = vpop.f32.mrf.mxu0
  %v887 = vadd.f32 0.0, %v886
  %888 = vmatmul.f32.gmra.mxu0 %v850
  %v889 = vpop.f32.mrf.mxu0
  %v890 = vadd.f32 0.0, %v889
  %891 = vmatmul.f32.gmra.mxu0 %v851
  %v892 = vpop.f32.mrf.mxu0
  %v893 = vadd.f32 0.0, %v892
  %894 = vmatmul.f32.gmra.mxu0 %v852
  %v895 = vpop.f32.mrf.mxu0
  %v896 = vadd.f32 0.0, %v895
  %897 = vmatmul.f32.gmra.mxu0 %v853
  %v898 = vpop.f32.mrf.mxu0
  %v899 = vadd.f32 0.0, %v898
  %900 = vmatmul.f32.gmra.mxu0 %v854
  %v901 = vpop.f32.mrf.mxu0
  %v902 = vadd.f32 0.0, %v901
  %903 = vmatmul.f32.gmra.mxu0 %v855
  %v904 = vpop.f32.mrf.mxu0
  %v905 = vadd.f32 0.0, %v904
  %906 = vmatmul.f32.gmra.mxu0 %v856
  %v907 = vpop.f32.mrf.mxu0
  %v908 = vadd.f32 0.0, %v907
  %909 = vmatmul.f32.gmra.mxu0 %v857
  %v910 = vpop.f32.mrf.mxu0
  %v911 = vadd.f32 0.0, %v910
  %912 = vmatmul.f32.gmra.mxu0 %v858
  %v913 = vpop.f32.mrf.mxu0
  %v914 = vadd.f32 0.0, %v913
  %915 = vmatmul.f32.gmra.mxu0 %v859
  %v916 = vpop.f32.mrf.mxu0
  %v917 = vadd.f32 0.0, %v916
  %918 = vmatmul.f32.gmra.mxu0 %v860
  %v919 = vpop.f32.mrf.mxu0
  %v920 = vadd.f32 0.0, %v919
  %921 = vmatmul.f32.gmra.mxu0 %v861
  %v922 = vpop.f32.mrf.mxu0
  %v923 = vadd.f32 0.0, %v922
  %924 = vmatmul.f32.gmra.mxu0 %v862
  %v925 = vpop.f32.mrf.mxu0
  %v926 = vadd.f32 0.0, %v925
  %927 = vdwg.mxu0
  %v928 = vsel %vm799, %v881, 0.0
  %v929 = vsel %vm800, %v884, 0.0
  %v930 = vsel %vm801, %v887, 0.0
  %v931 = vsel %vm802, %v890, 0.0
  %v932 = vsel %vm803, %v893, 0.0
  %v933 = vsel %vm804, %v896, 0.0
  %v934 = vsel %vm805, %v899, 0.0
  %v935 = vsel %vm806, %v902, 0.0
  %v936 = vsel %vm807, %v905, 0.0
  %v937 = vsel %vm808, %v908, 0.0
  %v938 = vsel %vm809, %v911, 0.0
  %v939 = vsel %vm810, %v914, 0.0
  %v940 = vsel %vm811, %v917, 0.0
  %v941 = vsel %vm812, %v920, 0.0
  %v942 = vsel %vm813, %v923, 0.0
  %v943 = vsel %vm814, %v926, 0.0
  %v944 = vsel %vm749, %v718, 0
  %v945 = vsel %vm750, %v720, 0
  %v946 = vsel %vm751, %v722, 0
  %v947 = vsel %vm752, %v724, 0
  %v948 = vsel %vm753, %v726, 0
  %v949 = vsel %vm754, %v728, 0
  %v950 = vsel %vm755, %v730, 0
  %v951 = vsel %vm756, %v732, 0
  %v952 = vsel %vm757, %v734, 0
  %v953 = vsel %vm758, %v736, 0
  %v954 = vsel %vm759, %v738, 0
  %v955 = vsel %vm760, %v740, 0
  %v956 = vsel %vm761, %v742, 0
  %v957 = vsel %vm762, %v744, 0
  %v958 = vsel %vm763, %v746, 0
  %v959 = vsel %vm764, %v748, 0
  %s960 = scalar_lea.vmem %s3, 128
  %v961 = vld [vmem:[%s960] sm:$0xff]
  %v962 = vld [vmem:[%s960 + $0x8] sm:$0xff]
  %v963 = vld [vmem:[%s960 + $0x10] sm:$0xff]
  %v964 = vld [vmem:[%s960 + $0x18] sm:$0xff]
  %v965 = vld [vmem:[%s960 + $0x20] sm:$0xff]
  %v966 = vld [vmem:[%s960 + $0x28] sm:$0xff]
  %v967 = vld [vmem:[%s960 + $0x30] sm:$0xff]
  %v968 = vld [vmem:[%s960 + $0x38] sm:$0xff]
  %v969 = vld [vmem:[%s960 + $0x40] sm:$0xff]
  %v970 = vld [vmem:[%s960 + $0x48] sm:$0xff]
  %v971 = vld [vmem:[%s960 + $0x50] sm:$0xff]
  %v972 = vld [vmem:[%s960 + $0x58] sm:$0xff]
  %v973 = vld [vmem:[%s960 + $0x60] sm:$0xff]
  %v974 = vld [vmem:[%s960 + $0x68] sm:$0xff]
  %v975 = vld [vmem:[%s960 + $0x70] sm:$0xff]
  %v976 = vld [vmem:[%s960 + $0x78] sm:$0xff]
  %v978 = vsel %vm44, %v961, 0
  %v981 = vsel %vm44, %v962, 0
  %v984 = vsel %vm44, %v963, 0
  %v987 = vsel %vm44, %v964, 0
  %v990 = vsel %vm44, %v965, 0
  %v993 = vsel %vm44, %v966, 0
  %v996 = vsel %vm44, %v967, 0
  %v999 = vsel %vm44, %v968, 0
  %v1002 = vsel %vm44, %v969, 0
  %v1005 = vsel %vm44, %v970, 0
  %v1008 = vsel %vm44, %v971, 0
  %v1011 = vsel %vm44, %v972, 0
  %v1014 = vsel %vm44, %v973, 0
  %v1017 = vsel %vm44, %v974, 0
  %v1020 = vsel %vm44, %v975, 0
  %v1023 = vsel %vm44, %v976, 0
  %1025 = vmatpush.xpose.msra.mxu0 %v1023
  %1026 = vmatpush.xpose.msra.mxu0 %v1020
  %1027 = vmatpush.xpose.msra.mxu0 %v1017
  %1028 = vmatpush.xpose.msra.mxu0 %v1014
  %1029 = vmatpush.xpose.msra.mxu0 %v1011
  %1030 = vmatpush.xpose.msra.mxu0 %v1008
  %1031 = vmatpush.xpose.msra.mxu0 %v1005
  %1032 = vmatpush.xpose.msra.mxu0 %v1002
  %1033 = vmatpush.xpose.msra.mxu0 %v999
  %1034 = vmatpush.xpose.msra.mxu0 %v996
  %1035 = vmatpush.xpose.msra.mxu0 %v993
  %1036 = vmatpush.xpose.msra.mxu0 %v990
  %1037 = vmatpush.xpose.msra.mxu0 %v987
  %1038 = vmatpush.xpose.msra.mxu0 %v984
  %1039 = vmatpush.xpose.msra.mxu0 %v981
  %1040 = vmatpush.xpose.msra.mxu0 %v978
  %1041 = vmatmul.f32.gmra.mxu0 %v525
  %v1042 = vpop.f32.mrf.mxu0
  %v1043 = vadd.f32 0.0, %v1042
  %1044 = vmatmul.f32.gmra.mxu0 %v528
  %v1045 = vpop.f32.mrf.mxu0
  %v1046 = vadd.f32 0.0, %v1045
  %1047 = vmatmul.f32.gmra.mxu0 %v531
  %v1048 = vpop.f32.mrf.mxu0
  %v1049 = vadd.f32 0.0, %v1048
  %1050 = vmatmul.f32.gmra.mxu0 %v534
  %v1051 = vpop.f32.mrf.mxu0
  %v1052 = vadd.f32 0.0, %v1051
  %1053 = vmatmul.f32.gmra.mxu0 %v537
  %v1054 = vpop.f32.mrf.mxu0
  %v1055 = vadd.f32 0.0, %v1054
  %1056 = vmatmul.f32.gmra.mxu0 %v540
  %v1057 = vpop.f32.mrf.mxu0
  %v1058 = vadd.f32 0.0, %v1057
  %1059 = vmatmul.f32.gmra.mxu0 %v543
  %v1060 = vpop.f32.mrf.mxu0
  %v1061 = vadd.f32 0.0, %v1060
  %1062 = vmatmul.f32.gmra.mxu0 %v546
  %v1063 = vpop.f32.mrf.mxu0
  %v1064 = vadd.f32 0.0, %v1063
  %1065 = vmatmul.f32.gmra.mxu0 %v549
  %v1066 = vpop.f32.mrf.mxu0
  %v1067 = vadd.f32 0.0, %v1066
  %1068 = vmatmul.f32.gmra.mxu0 %v552
  %v1069 = vpop.f32.mrf.mxu0
  %v1070 = vadd.f32 0.0, %v1069
  %1071 = vmatmul.f32.gmra.mxu0 %v555
  %v1072 = vpop.f32.mrf.mxu0
  %v1073 = vadd.f32 0.0, %v1072
  %1074 = vmatmul.f32.gmra.mxu0 %v558
  %v1075 = vpop.f32.mrf.mxu0
  %v1076 = vadd.f32 0.0, %v1075
  %1077 = vmatmul.f32.gmra.mxu0 %v561
  %v1078 = vpop.f32.mrf.mxu0
  %v1079 = vadd.f32 0.0, %v1078
  %1080 = vmatmul.f32.gmra.mxu0 %v564
  %v1081 = vpop.f32.mrf.mxu0
  %v1082 = vadd.f32 0.0, %v1081
  %1083 = vmatmul.f32.gmra.mxu0 %v567
  %v1084 = vpop.f32.mrf.mxu0
  %v1085 = vadd.f32 0.0, %v1084
  %1086 = vmatmul.f32.gmra.mxu0 %v570
  %v1087 = vpop.f32.mrf.mxu0
  %v1088 = vadd.f32 0.0, %v1087
  %1089 = vdwg.mxu0
  %1090 = vmax.xlane.f32.xlu0 %v1043
  %v1091 = vpop.xlane.xlu0 %1090
  %1092 = vmax.xlane.f32.xlu0 %v1046
  %v1093 = vpop.xlane.xlu0 %1092
  %1094 = vmax.xlane.f32.xlu0 %v1049
  %v1095 = vpop.xlane.xlu0 %1094
  %1096 = vmax.xlane.f32.xlu0 %v1052
  %v1097 = vpop.xlane.xlu0 %1096
  %1098 = vmax.xlane.f32.xlu0 %v1055
  %v1099 = vpop.xlane.xlu0 %1098
  %1100 = vmax.xlane.f32.xlu0 %v1058
  %v1101 = vpop.xlane.xlu0 %1100
  %1102 = vmax.xlane.f32.xlu0 %v1061
  %v1103 = vpop.xlane.xlu0 %1102
  %1104 = vmax.xlane.f32.xlu0 %v1064
  %v1105 = vpop.xlane.xlu0 %1104
  %1106 = vmax.xlane.f32.xlu0 %v1067
  %v1107 = vpop.xlane.xlu0 %1106
  %1108 = vmax.xlane.f32.xlu0 %v1070
  %v1109 = vpop.xlane.xlu0 %1108
  %1110 = vmax.xlane.f32.xlu0 %v1073
  %v1111 = vpop.xlane.xlu0 %1110
  %1112 = vmax.xlane.f32.xlu0 %v1076
  %v1113 = vpop.xlane.xlu0 %1112
  %1114 = vmax.xlane.f32.xlu0 %v1079
  %v1115 = vpop.xlane.xlu0 %1114
  %1116 = vmax.xlane.f32.xlu0 %v1082
  %v1117 = vpop.xlane.xlu0 %1116
  %1118 = vmax.xlane.f32.xlu0 %v1085
  %v1119 = vpop.xlane.xlu0 %1118
  %1120 = vmax.xlane.f32.xlu0 %v1088
  %v1121 = vpop.xlane.xlu0 %1120
  %1122 = vmax.index.xlane.f32.xlu0 %v1043
  %v1123 = vpop.xlane.xlu0 %1122
  %1124 = vmax.index.xlane.f32.xlu0 %v1046
  %v1125 = vpop.xlane.xlu0 %1124
  %1126 = vmax.index.xlane.f32.xlu0 %v1049
  %v1127 = vpop.xlane.xlu0 %1126
  %1128 = vmax.index.xlane.f32.xlu0 %v1052
  %v1129 = vpop.xlane.xlu0 %1128
  %1130 = vmax.index.xlane.f32.xlu0 %v1055
  %v1131 = vpop.xlane.xlu0 %1130
  %1132 = vmax.index.xlane.f32.xlu0 %v1058
  %v1133 = vpop.xlane.xlu0 %1132
  %1134 = vmax.index.xlane.f32.xlu0 %v1061
  %v1135 = vpop.xlane.xlu0 %1134
  %1136 = vmax.index.xlane.f32.xlu0 %v1064
  %v1137 = vpop.xlane.xlu0 %1136
  %1138 = vmax.index.xlane.f32.xlu0 %v1067
  %v1139 = vpop.xlane.xlu0 %1138
  %1140 = vmax.index.xlane.f32.xlu0 %v1070
  %v1141 = vpop.xlane.xlu0 %1140
  %1142 = vmax.index.xlane.f32.xlu0 %v1073
  %v1143 = vpop.xlane.xlu0 %1142
  %1144 = vmax.index.xlane.f32.xlu0 %v1076
  %v1145 = vpop.xlane.xlu0 %1144
  %1146 = vmax.index.xlane.f32.xlu0 %v1079
  %v1147 = vpop.xlane.xlu0 %1146
  %1148 = vmax.index.xlane.f32.xlu0 %v1082
  %v1149 = vpop.xlane.xlu0 %1148
  %1150 = vmax.index.xlane.f32.xlu0 %v1085
  %v1151 = vpop.xlane.xlu0 %1150
  %1152 = vmax.index.xlane.f32.xlu0 %v1088
  %v1153 = vpop.xlane.xlu0 %1152
  %vm1154 = vcmp.gt.f32.partialorder %v1091, %v686
  %vm1155 = vcmp.gt.f32.partialorder %v1093, %v688
  %vm1156 = vcmp.gt.f32.partialorder %v1095, %v690
  %vm1157 = vcmp.gt.f32.partialorder %v1097, %v692
  %vm1158 = vcmp.gt.f32.partialorder %v1099, %v694
  %vm1159 = vcmp.gt.f32.partialorder %v1101, %v696
  %vm1160 = vcmp.gt.f32.partialorder %v1103, %v698
  %vm1161 = vcmp.gt.f32.partialorder %v1105, %v700
  %vm1162 = vcmp.gt.f32.partialorder %v1107, %v702
  %vm1163 = vcmp.gt.f32.partialorder %v1109, %v704
  %vm1164 = vcmp.gt.f32.partialorder %v1111, %v706
  %vm1165 = vcmp.gt.f32.partialorder %v1113, %v708
  %vm1166 = vcmp.gt.f32.partialorder %v1115, %v710
  %vm1167 = vcmp.gt.f32.partialorder %v1117, %v712
  %vm1168 = vcmp.gt.f32.partialorder %v1119, %v714
  %vm1169 = vcmp.gt.f32.partialorder %v1121, %v716
  %vm1170 = vcmp.eq.s32.totalorder %v766, %v1123
  %vm1171 = vcmp.eq.s32.totalorder %v766, %v1125
  %vm1172 = vcmp.eq.s32.totalorder %v766, %v1127
  %vm1173 = vcmp.eq.s32.totalorder %v766, %v1129
  %vm1174 = vcmp.eq.s32.totalorder %v766, %v1131
  %vm1175 = vcmp.eq.s32.totalorder %v766, %v1133
  %vm1176 = vcmp.eq.s32.totalorder %v766, %v1135
  %vm1177 = vcmp.eq.s32.totalorder %v766, %v1137
  %vm1178 = vcmp.eq.s32.totalorder %v766, %v1139
  %vm1179 = vcmp.eq.s32.totalorder %v766, %v1141
  %vm1180 = vcmp.eq.s32.totalorder %v766, %v1143
  %vm1181 = vcmp.eq.s32.totalorder %v766, %v1145
  %vm1182 = vcmp.eq.s32.totalorder %v766, %v1147
  %vm1183 = vcmp.eq.s32.totalorder %v766, %v1149
  %vm1184 = vcmp.eq.s32.totalorder %v766, %v1151
  %vm1185 = vcmp.eq.s32.totalorder %v766, %v1153
  %v1186 = vsel %vm1154, 1, 0
  %v1187 = vsel %vm1155, 1, 0
  %v1188 = vsel %vm1156, 1, 0
  %v1189 = vsel %vm1157, 1, 0
  %v1190 = vsel %vm1158, 1, 0
  %v1191 = vsel %vm1159, 1, 0
  %v1192 = vsel %vm1160, 1, 0
  %v1193 = vsel %vm1161, 1, 0
  %v1194 = vsel %vm1162, 1, 0
  %v1195 = vsel %vm1163, 1, 0
  %v1196 = vsel %vm1164, 1, 0
  %v1197 = vsel %vm1165, 1, 0
  %v1198 = vsel %vm1166, 1, 0
  %v1199 = vsel %vm1167, 1, 0
  %v1200 = vsel %vm1168, 1, 0
  %v1201 = vsel %vm1169, 1, 0
  %vm1202 = vcmp.eq.s32.totalorder %v1186, 1
  %vm1203 = vcmp.eq.s32.totalorder %v1187, 1
  %vm1204 = vcmp.eq.s32.totalorder %v1188, 1
  %vm1205 = vcmp.eq.s32.totalorder %v1189, 1
  %vm1206 = vcmp.eq.s32.totalorder %v1190, 1
  %vm1207 = vcmp.eq.s32.totalorder %v1191, 1
  %vm1208 = vcmp.eq.s32.totalorder %v1192, 1
  %vm1209 = vcmp.eq.s32.totalorder %v1193, 1
  %vm1210 = vcmp.eq.s32.totalorder %v1194, 1
  %vm1211 = vcmp.eq.s32.totalorder %v1195, 1
  %vm1212 = vcmp.eq.s32.totalorder %v1196, 1
  %vm1213 = vcmp.eq.s32.totalorder %v1197, 1
  %vm1214 = vcmp.eq.s32.totalorder %v1198, 1
  %vm1215 = vcmp.eq.s32.totalorder %v1199, 1
  %vm1216 = vcmp.eq.s32.totalorder %v1200, 1
  %vm1217 = vcmp.eq.s32.totalorder %v1201, 1
  %vm1218 = vmand %vm1170, %vm1202
  %vm1219 = vmand %vm1171, %vm1203
  %vm1220 = vmand %vm1172, %vm1204
  %vm1221 = vmand %vm1173, %vm1205
  %vm1222 = vmand %vm1174, %vm1206
  %vm1223 = vmand %vm1175, %vm1207
  %vm1224 = vmand %vm1176, %vm1208
  %vm1225 = vmand %vm1177, %vm1209
  %vm1226 = vmand %vm1178, %vm1210
  %vm1227 = vmand %vm1179, %vm1211
  %vm1228 = vmand %vm1180, %vm1212
  %vm1229 = vmand %vm1181, %vm1213
  %vm1230 = vmand %vm1182, %vm1214
  %vm1231 = vmand %vm1183, %vm1215
  %vm1232 = vmand %vm1184, %vm1216
  %vm1233 = vmand %vm1185, %vm1217
  %v1234 = vsel %vm1218, 1, 0
  %v1235 = vsel %vm1219, 1, 0
  %v1236 = vsel %vm1220, 1, 0
  %v1237 = vsel %vm1221, 1, 0
  %v1238 = vsel %vm1222, 1, 0
  %v1239 = vsel %vm1223, 1, 0
  %v1240 = vsel %vm1224, 1, 0
  %v1241 = vsel %vm1225, 1, 0
  %v1242 = vsel %vm1226, 1, 0
  %v1243 = vsel %vm1227, 1, 0
  %v1244 = vsel %vm1228, 1, 0
  %v1245 = vsel %vm1229, 1, 0
  %v1246 = vsel %vm1230, 1, 0
  %v1247 = vsel %vm1231, 1, 0
  %v1248 = vsel %vm1232, 1, 0
  %v1249 = vsel %vm1233, 1, 0
  %v1250 = vcvt.s32.f32 %v1234
  %v1251 = vcvt.s32.f32 %v1235
  %v1252 = vcvt.s32.f32 %v1236
  %v1253 = vcvt.s32.f32 %v1237
  %v1254 = vcvt.s32.f32 %v1238
  %v1255 = vcvt.s32.f32 %v1239
  %v1256 = vcvt.s32.f32 %v1240
  %v1257 = vcvt.s32.f32 %v1241
  %v1258 = vcvt.s32.f32 %v1242
  %v1259 = vcvt.s32.f32 %v1243
  %v1260 = vcvt.s32.f32 %v1244
  %v1261 = vcvt.s32.f32 %v1245
  %v1262 = vcvt.s32.f32 %v1246
  %v1263 = vcvt.s32.f32 %v1247
  %v1264 = vcvt.s32.f32 %v1248
  %v1265 = vcvt.s32.f32 %v1249
  %1266 = vmatpush.msra.mxu0 %v976
  %1267 = vmatpush.msra.mxu0 %v975
  %1268 = vmatpush.msra.mxu0 %v974
  %1269 = vmatpush.msra.mxu0 %v973
  %1270 = vmatpush.msra.mxu0 %v972
  %1271 = vmatpush.msra.mxu0 %v971
  %1272 = vmatpush.msra.mxu0 %v970
  %1273 = vmatpush.msra.mxu0 %v969
  %1274 = vmatpush.msra.mxu0 %v968
  %1275 = vmatpush.msra.mxu0 %v967
  %1276 = vmatpush.msra.mxu0 %v966
  %1277 = vmatpush.msra.mxu0 %v965
  %1278 = vmatpush.msra.mxu0 %v964
  %1279 = vmatpush.msra.mxu0 %v963
  %1280 = vmatpush.msra.mxu0 %v962
  %1281 = vmatpush.msra.mxu0 %v961
  %1282 = vmatmul.f32.gmra.mxu0 %v1250
  %v1283 = vpop.f32.mrf.mxu0
  %v1284 = vadd.f32 0.0, %v1283
  %1285 = vmatmul.f32.gmra.mxu0 %v1251
  %v1286 = vpop.f32.mrf.mxu0
  %v1287 = vadd.f32 0.0, %v1286
  %1288 = vmatmul.f32.gmra.mxu0 %v1252
  %v1289 = vpop.f32.mrf.mxu0
  %v1290 = vadd.f32 0.0, %v1289
  %1291 = vmatmul.f32.gmra.mxu0 %v1253
  %v1292 = vpop.f32.mrf.mxu0
  %v1293 = vadd.f32 0.0, %v1292
  %1294 = vmatmul.f32.gmra.mxu0 %v1254
  %v1295 = vpop.f32.mrf.mxu0
  %v1296 = vadd.f32 0.0, %v1295
  %1297 = vmatmul.f32.gmra.mxu0 %v1255
  %v1298 = vpop.f32.mrf.mxu0
  %v1299 = vadd.f32 0.0, %v1298
  %1300 = vmatmul.f32.gmra.mxu0 %v1256
  %v1301 = vpop.f32.mrf.mxu0
  %v1302 = vadd.f32 0.0, %v1301
  %1303 = vmatmul.f32.gmra.mxu0 %v1257
  %v1304 = vpop.f32.mrf.mxu0
  %v1305 = vadd.f32 0.0, %v1304
  %1306 = vmatmul.f32.gmra.mxu0 %v1258
  %v1307 = vpop.f32.mrf.mxu0
  %v1308 = vadd.f32 0.0, %v1307
  %1309 = vmatmul.f32.gmra.mxu0 %v1259
  %v1310 = vpop.f32.mrf.mxu0
  %v1311 = vadd.f32 0.0, %v1310
  %1312 = vmatmul.f32.gmra.mxu0 %v1260
  %v1313 = vpop.f32.mrf.mxu0
  %v1314 = vadd.f32 0.0, %v1313
  %1315 = vmatmul.f32.gmra.mxu0 %v1261
  %v1316 = vpop.f32.mrf.mxu0
  %v1317 = vadd.f32 0.0, %v1316
  %1318 = vmatmul.f32.gmra.mxu0 %v1262
  %v1319 = vpop.f32.mrf.mxu0
  %v1320 = vadd.f32 0.0, %v1319
  %1321 = vmatmul.f32.gmra.mxu0 %v1263
  %v1322 = vpop.f32.mrf.mxu0
  %v1323 = vadd.f32 0.0, %v1322
  %1324 = vmatmul.f32.gmra.mxu0 %v1264
  %v1325 = vpop.f32.mrf.mxu0
  %v1326 = vadd.f32 0.0, %v1325
  %1327 = vmatmul.f32.gmra.mxu0 %v1265
  %v1328 = vpop.f32.mrf.mxu0
  %v1329 = vadd.f32 0.0, %v1328
  %1330 = vdwg.mxu0
  %v1331 = vsel %vm1202, %v1284, %v928
  %v1332 = vsel %vm1203, %v1287, %v929
  %v1333 = vsel %vm1204, %v1290, %v930
  %v1334 = vsel %vm1205, %v1293, %v931
  %v1335 = vsel %vm1206, %v1296, %v932
  %v1336 = vsel %vm1207, %v1299, %v933
  %v1337 = vsel %vm1208, %v1302, %v934
  %v1338 = vsel %vm1209, %v1305, %v935
  %v1339 = vsel %vm1210, %v1308, %v936
  %v1340 = vsel %vm1211, %v1311, %v937
  %v1341 = vsel %vm1212, %v1314, %v938
  %v1342 = vsel %vm1213, %v1317, %v939
  %v1343 = vsel %vm1214, %v1320, %v940
  %v1344 = vsel %vm1215, %v1323, %v941
  %v1345 = vsel %vm1216, %v1326, %v942
  %v1346 = vsel %vm1217, %v1329, %v943
  %v1347 = vadd.s32 %v1123, 128
  %v1348 = vadd.s32 %v1125, 128
  %v1349 = vadd.s32 %v1127, 128
  %v1350 = vadd.s32 %v1129, 128
  %v1351 = vadd.s32 %v1131, 128
  %v1352 = vadd.s32 %v1133, 128
  %v1353 = vadd.s32 %v1135, 128
  %v1354 = vadd.s32 %v1137, 128
  %v1355 = vadd.s32 %v1139, 128
  %v1356 = vadd.s32 %v1141, 128
  %v1357 = vadd.s32 %v1143, 128
  %v1358 = vadd.s32 %v1145, 128
  %v1359 = vadd.s32 %v1147, 128
  %v1360 = vadd.s32 %v1149, 128
  %v1361 = vadd.s32 %v1151, 128
  %v1362 = vadd.s32 %v1153, 128
  %v1363 = vsel %vm1154, %v1347, %v944
  %v1364 = vsel %vm1155, %v1348, %v945
  %v1365 = vsel %vm1156, %v1349, %v946
  %v1366 = vsel %vm1157, %v1350, %v947
  %v1367 = vsel %vm1158, %v1351, %v948
  %v1368 = vsel %vm1159, %v1352, %v949
  %v1369 = vsel %vm1160, %v1353, %v950
  %v1370 = vsel %vm1161, %v1354, %v951
  %v1371 = vsel %vm1162, %v1355, %v952
  %v1372 = vsel %vm1163, %v1356, %v953
  %v1373 = vsel %vm1164, %v1357, %v954
  %v1374 = vsel %vm1165, %v1358, %v955
  %v1375 = vsel %vm1166, %v1359, %v956
  %v1376 = vsel %vm1167, %v1360, %v957
  %v1377 = vsel %vm1168, %v1361, %v958
  %v1378 = vsel %vm1169, %v1362, %v959
  %v1379 = vsub.f32 %v1331, %v236
  %v1380 = vsub.f32 %v1332, %v237
  %v1381 = vsub.f32 %v1333, %v238
  %v1382 = vsub.f32 %v1334, %v239
  %v1383 = vsub.f32 %v1335, %v240
  %v1384 = vsub.f32 %v1336, %v241
  %v1385 = vsub.f32 %v1337, %v242
  %v1386 = vsub.f32 %v1338, %v243
  %v1387 = vsub.f32 %v1339, %v244
  %v1388 = vsub.f32 %v1340, %v245
  %v1389 = vsub.f32 %v1341, %v246
  %v1390 = vsub.f32 %v1342, %v247
  %v1391 = vsub.f32 %v1343, %v248
  %v1392 = vsub.f32 %v1344, %v249
  %v1393 = vsub.f32 %v1345, %v250
  %v1394 = vsub.f32 %v1346, %v251
  %v1395 = vmul.f32 %v1379, %v1379
  %v1396 = vmul.f32 %v1380, %v1380
  %v1397 = vmul.f32 %v1381, %v1381
  %v1398 = vmul.f32 %v1382, %v1382
  %v1399 = vmul.f32 %v1383, %v1383
  %v1400 = vmul.f32 %v1384, %v1384
  %v1401 = vmul.f32 %v1385, %v1385
  %v1402 = vmul.f32 %v1386, %v1386
  %v1403 = vmul.f32 %v1387, %v1387
  %v1404 = vmul.f32 %v1388, %v1388
  %v1405 = vmul.f32 %v1389, %v1389
  %v1406 = vmul.f32 %v1390, %v1390
  %v1407 = vmul.f32 %v1391, %v1391
  %v1408 = vmul.f32 %v1392, %v1392
  %v1409 = vmul.f32 %v1393, %v1393
  %v1410 = vmul.f32 %v1394, %v1394
  %v1411 = vsel %vm44, %v1395, 0.0
  %v1412 = vsel %vm44, %v1396, 0.0
  %v1413 = vadd.f32 %v1411, %v1412
  %v1414 = vsel %vm44, %v1397, 0.0
  %v1415 = vadd.f32 %v1413, %v1414
  %v1416 = vsel %vm44, %v1398, 0.0
  %v1417 = vadd.f32 %v1415, %v1416
  %v1418 = vsel %vm44, %v1399, 0.0
  %v1419 = vadd.f32 %v1417, %v1418
  %v1420 = vsel %vm44, %v1400, 0.0
  %v1421 = vadd.f32 %v1419, %v1420
  %v1422 = vsel %vm44, %v1401, 0.0
  %v1423 = vadd.f32 %v1421, %v1422
  %v1424 = vsel %vm44, %v1402, 0.0
  %v1425 = vadd.f32 %v1423, %v1424
  %v1426 = vsel %vm44, %v1403, 0.0
  %v1427 = vadd.f32 %v1425, %v1426
  %v1428 = vsel %vm44, %v1404, 0.0
  %v1429 = vadd.f32 %v1427, %v1428
  %v1430 = vsel %vm44, %v1405, 0.0
  %v1431 = vadd.f32 %v1429, %v1430
  %v1432 = vsel %vm44, %v1406, 0.0
  %v1433 = vadd.f32 %v1431, %v1432
  %v1434 = vsel %vm44, %v1407, 0.0
  %v1435 = vadd.f32 %v1433, %v1434
  %v1436 = vsel %vm44, %v1408, 0.0
  %v1437 = vadd.f32 %v1435, %v1436
  %v1438 = vsel %vm44, %v1409, 0.0
  %v1439 = vadd.f32 %v1437, %v1438
  %v1440 = vsel %vm44, %v1410, 0.0
  %v1441 = vadd.f32 %v1439, %v1440
  %v1442 = vrot.slane %v1441, 4
  %v1443 = vadd.f32 %v1441, %v1442
  %v1444 = vrot.slane %v1443, 2
  %v1445 = vadd.f32 %v1443, %v1444
  %v1446 = vrot.slane %v1445, 1
  %v1447 = vadd.f32 %v1445, %v1446
  %vm1448 = vcmask 253952
  %1449 = vst.msk [vmem:[%s6] sm:$0x1] %vm1448, %v1447
  %1450 = vst.msk [vmem:[%s4] sm:$0xff] %vm44, %v1331
  %1451 = vst.msk [vmem:[%s4 + $0x8] sm:$0xff] %vm44, %v1332
  %1452 = vst.msk [vmem:[%s4 + $0x10] sm:$0xff] %vm44, %v1333
  %1453 = vst.msk [vmem:[%s4 + $0x18] sm:$0xff] %vm44, %v1334
  %1454 = vst.msk [vmem:[%s4 + $0x20] sm:$0xff] %vm44, %v1335
  %1455 = vst.msk [vmem:[%s4 + $0x28] sm:$0xff] %vm44, %v1336
  %1456 = vst.msk [vmem:[%s4 + $0x30] sm:$0xff] %vm44, %v1337
  %1457 = vst.msk [vmem:[%s4 + $0x38] sm:$0xff] %vm44, %v1338
  %1458 = vst.msk [vmem:[%s4 + $0x40] sm:$0xff] %vm44, %v1339
  %1459 = vst.msk [vmem:[%s4 + $0x48] sm:$0xff] %vm44, %v1340
  %1460 = vst.msk [vmem:[%s4 + $0x50] sm:$0xff] %vm44, %v1341
  %1461 = vst.msk [vmem:[%s4 + $0x58] sm:$0xff] %vm44, %v1342
  %1462 = vst.msk [vmem:[%s4 + $0x60] sm:$0xff] %vm44, %v1343
  %1463 = vst.msk [vmem:[%s4 + $0x68] sm:$0xff] %vm44, %v1344
  %1464 = vst.msk [vmem:[%s4 + $0x70] sm:$0xff] %vm44, %v1345
  %1465 = vst.msk [vmem:[%s4 + $0x78] sm:$0xff] %vm44, %v1346
  %v1466 = vperm.slane %v1363, %v766
  %v1467 = vadd.s32 %v766, 4294967288
  %v1468 = vperm.slane %v1364, %v1467
  %vm1469 = vcmask 130112
  %v1470 = vsel %vm1469, %v1468, %v1466
  %v1471 = vadd.s32 %v766, 4294967280
  %v1472 = vperm.slane %v1365, %v1471
  %vm1473 = vcmask 195712
  %v1474 = vsel %vm1473, %v1472, %v1470
  %v1475 = vadd.s32 %v766, 4294967272
  %v1476 = vperm.slane %v1366, %v1475
  %vm1477 = vcmask 261312
  %v1478 = vsel %vm1477, %v1476, %v1474
  %v1479 = vadd.s32 %v766, 4294967264
  %v1480 = vperm.slane %v1367, %v1479
  %vm1481 = vcmask 326912
  %v1482 = vsel %vm1481, %v1480, %v1478
  %v1483 = vadd.s32 %v766, 4294967256
  %v1484 = vperm.slane %v1368, %v1483
  %vm1485 = vcmask 392512
  %v1486 = vsel %vm1485, %v1484, %v1482
  %v1487 = vadd.s32 %v766, 4294967248
  %v1488 = vperm.slane %v1369, %v1487
  %vm1489 = vcmask 458112
  %v1490 = vsel %vm1489, %v1488, %v1486
  %v1491 = vadd.s32 %v766, 4294967240
  %v1492 = vperm.slane %v1370, %v1491
  %vm1493 = vcmask 523712
  %v1494 = vsel %vm1493, %v1492, %v1490
  %v1495 = vadd.s32 %v766, 4294967232
  %v1496 = vperm.slane %v1371, %v1495
  %vm1497 = vcmask 589312
  %v1498 = vsel %vm1497, %v1496, %v1494
  %v1499 = vadd.s32 %v766, 4294967224
  %v1500 = vperm.slane %v1372, %v1499
  %vm1501 = vcmask 654912
  %v1502 = vsel %vm1501, %v1500, %v1498
  %v1503 = vadd.s32 %v766, 4294967216
  %v1504 = vperm.slane %v1373, %v1503
  %vm1505 = vcmask 720512
  %v1506 = vsel %vm1505, %v1504, %v1502
  %v1507 = vadd.s32 %v766, 4294967208
  %v1508 = vperm.slane %v1374, %v1507
  %vm1509 = vcmask 786112
  %v1510 = vsel %vm1509, %v1508, %v1506
  %v1511 = vadd.s32 %v766, 4294967200
  %v1512 = vperm.slane %v1375, %v1511
  %vm1513 = vcmask 851712
  %v1514 = vsel %vm1513, %v1512, %v1510
  %v1515 = vadd.s32 %v766, 4294967192
  %v1516 = vperm.slane %v1376, %v1515
  %vm1517 = vcmask 917312
  %v1518 = vsel %vm1517, %v1516, %v1514
  %v1519 = vadd.s32 %v766, 4294967184
  %v1520 = vperm.slane %v1377, %v1519
  %vm1521 = vcmask 982912
  %v1522 = vsel %vm1521, %v1520, %v1518
  %v1523 = vadd.s32 %v766, 4294967176
  %v1524 = vperm.slane %v1378, %v1523
  %vm1525 = vcmask 1048512
  %v1526 = vsel %vm1525, %v1524, %v1522
  %1527 = vst [vmem:[%s5] sm:$0x1] %v1526
  // Predicated region
  $region18: #{vq_encode.1} parent=0 // pred_check
    _
  $region19: #{vq_encode.1} parent=0 // pred_check_branch
    %1529 = sbr.rel (0) target = $region21
  $region20: #{vq_encode.1} parent=0 // pred_region
    _
  $region21: #{vq_encode.1} parent=0 // pred_fallthru
    _
  // Predicated region
  $region22: #{vq_encode.1} parent=0 // pred_check
    _
  $region23: #{vq_encode.1} parent=0 // pred_check_branch
    %1531 = sbr.rel (0) target = $region25
  $region24: #{vq_encode.1} parent=0 // pred_region
    _
  $region25: #{vq_encode.1} parent=0 // pred_fallthru
    _
  // Predicated region
  $region26: #{vq_encode.1} parent=0 // pred_check
    _
  $region27: #{vq_encode.1} parent=0 // pred_check_branch
    %1533 = sbr.rel (0) target = $region29
  $region28: #{vq_encode.1} parent=0 // pred_region
    _
  $region29: #{vq_encode.1} parent=0 // pred_fallthru
    _
  // Predicated region
  $region30: #{vq_encode.1} parent=0 // pred_check
    _
  $region31: #{vq_encode.1} parent=0 // pred_check_branch
    %1535 = sbr.rel (0) target = $region33
  $region32: #{vq_encode.1} parent=0 // pred_region
    _
  $region33: #{vq_encode.1} parent=0 // pred_fallthru
    _
  // Predicated region
  $region34: #{vq_encode.1} parent=0 // pred_check
    _
  $region35: #{vq_encode.1} parent=0 // pred_check_branch
    %1537 = sbr.rel (0) target = $region37
  $region36: #{vq_encode.1} parent=0 // pred_region
    _
  $region37: #{vq_encode.1} parent=0 // pred_fallthru
    _
  // Predicated region
  $region38: #{vq_encode.1} parent=0 // pred_check
    _
  $region39: #{vq_encode.1} parent=0 // pred_check_branch
    %1539 = sbr.rel (0) target = $region41
  $region40: #{vq_encode.1} parent=0 // pred_region
    _
  $region41: #{vq_encode.1} parent=0 // pred_fallthru
    _

</llo_original>
